<compile_context>
chip_gen: v7x
topology: tpu7x:2x2x1
jax: 0.10.0
libtpu: 0.0.40
codegen_flags: <defaults>
</compile_context>

<pallas_src>
import functools

import jax
import jax.numpy as jnp
from jax import lax
from jax.experimental import pallas as pl
from jax.experimental.pallas import tpu as pltpu


def _vq_kernel(z_ref, neg2e_ref, embT_ref, esq_ref,
               zq_ref, idx_ref, esum_ref, ssep_ref,
               *, s_total, needs_mask, use_bf16):
    # Block shapes:
    #   z_ref     (1, C, ts)      channel-major slab of ts spatial positions
    #   neg2e_ref (n_e, C)        -2 * codebook (grid-invariant, folded const)
    #   embT_ref  (C, n_e)        codebook transpose (grid-invariant)
    #   esq_ref   (n_e, 1)        per-code squared norms (grid-invariant)
    #   zq_ref    (1, C, ts)      quantized vectors, channel-major (NCHW native)
    #   idx_ref   (1, 1, 1, ts)   nearest-code indices, lane-dense row
    #   esum_ref  (1, 1, 1, n_e)  per-tile column sums of the one-hots
    #   ssep_ref  (1, 1, 1, ts)   per-position sum_c (z_q - z)^2 partials
    f32 = jnp.float32
    n_e = neg2e_ref.shape[0]
    ts = z_ref.shape[2]

    z = z_ref[0].astype(f32)                                        # (C, ts)

    if use_bf16:
        lhs = neg2e_ref[...].astype(jnp.bfloat16)
        rhs = z.astype(jnp.bfloat16)
    else:
        lhs = neg2e_ref[...]
        rhs = z
    # scoresT[k, s] = -2 <e_k, z_s>   (the -2 is folded into the codebook,
    # which is exact in f32, so the distances are bit-identical to -2*dot).
    scoresT = lax.dot_general(lhs, rhs, (((1,), (0,)), ((), ())),
                              preferred_element_type=f32)           # (n_e, ts)
    # Reduced distance ||e_k||^2 - 2<e_k, z_s>.  (||z_s||^2 dropped: per-column
    # constant, cannot change the argmin; this value stays kernel-internal.)
    dT = esq_ref[...] + scoresT                                     # (n_e, ts)

    # First-min argmin over the code (sublane) axis, matching torch.argmin.
    sub_iota = lax.broadcasted_iota(jnp.int32, (n_e, ts), 0)
    min_d = jnp.min(dT, axis=0, keepdims=True)                      # (1, ts)
    cand = jnp.where(dT == min_d, sub_iota.astype(f32), f32(n_e))
    idx = jnp.min(cand, axis=0).astype(jnp.int32)                   # (ts,)

    # One-hot selection matrix (kernel-internal only; never written to HBM).
    encT = jnp.where(sub_iota == idx[None, :], 1.0, 0.0)            # (n_e, ts)

    # Quantized vectors, already channel-major for the NCHW writeback:
    #   z_q[c, s] = sum_k E[k, c] * encT[k, s]   (exact one-hot selection)
    zq = lax.dot_general(embT_ref[...], encT, (((1,), (0,)), ((), ())),
                         preferred_element_type=f32)                # (C, ts)

    zq_ref[...] = zq[None].astype(zq_ref.dtype)
    idx_ref[...] = idx.reshape(1, 1, 1, ts)

    # Fused reductions (avoid a second HBM pass over the large outputs).
    diff = zq - z
    ssep = jnp.sum(diff * diff, axis=0)                             # (ts,)
    if needs_mask:
        # Tail tile: positions >= s_total are padding -> exclude from partials.
        pos = (pl.program_id(1) * ts
               + lax.broadcasted_iota(jnp.int32, (1, ts), 1))       # (1, ts)
        valid = pos < s_total
        encT = jnp.where(valid, encT, 0.0)
        ssep = jnp.where(valid[0], ssep, 0.0)

    esum_ref[...] = jnp.sum(encT, axis=1).reshape(1, 1, 1, n_e)
    ssep_ref[...] = ssep.reshape(1, 1, 1, ts)


def _vmem_capacity_bytes():
    try:
        return int(pltpu.get_tpu_info().vmem_capacity_bytes)
    except Exception:
        return 64 << 20  # conservative fallback (v7x per-core VMEM)


def _const_spec(shape):
    """BlockSpec for a grid-invariant input; single-buffer when supported."""
    imap = lambda b, i: (0, 0)
    if hasattr(pl, "Buffered"):
        try:
            return pl.BlockSpec(shape, imap, pipeline_mode=pl.Buffered(1))
        except Exception:
            pass
    return pl.BlockSpec(shape, imap)


def _pick_spatial_tile(S, C, n_e, B, vmem_cap):
    """Spatial tile sized from the VMEM budget; multiple of 128 or full S."""
    budget = int(0.55 * vmem_cap)
    # Per-position bytes: double-buffered z/zq/idx/ssep I/O plus ~5 live
    # (n_e, ts) f32 temporaries (scoresT, dT, cand, encT, iota) and the
    # (C, ts) f32 z / zq / diff working set.
    per_pos = (16 * C + 16) + (20 * n_e) + (16 * C)
    # Grid-invariant codebook blocks (assume 2 buffers for conservatism; esq
    # lane-pads to 128).
    const_b = 2 * (2 * n_e * C * 4 + n_e * 128 * 4)
    cap = (budget - const_b) // per_pos
    cap = max(128, min(int(cap), 2048))
    cap = (cap // 128) * 128
    ts = S if S <= cap else cap
    if B == 1 and S > 128:
        # Keep >= 2 spatial tiles so both v7x TensorCores get work.
        half = ((S + 1) // 2 + 127) // 128 * 128
        if half < S:
            ts = min(ts, half)
    return ts


def vector_quantize(z_nchw, embedding, beta, *, return_encodings=True,
                    use_bf16_scores=None):
    """Forward pass of VectorQuantizer.

    z_nchw:    (B, C, H, W) with C == e_dim  (PyTorch conv layout)
    embedding: (n_e, e_dim) codebook weights
    Returns (z_q_nchw, loss, (perplexity, min_encodings, min_encoding_indices)).
    """
    B, C, H, W = z_nchw.shape
    n_e, e_dim = embedding.shape
    assert C == e_dim
    S = H * W
    N = B * S

    if use_bf16_scores is None:
        # Only worth it in the MXU-bound regime; tiny C is HBM-bound and f32
        # keeps the argmin bit-identical to the reference.
        use_bf16_scores = e_dim >= 64

    vmem_cap = _vmem_capacity_bytes()
    ts = _pick_spatial_tile(S, C, n_e, B, vmem_cap)
    n_t = pl.cdiv(S, ts)
    needs_mask = (S % ts) != 0
    grid = (B, n_t)

    # Free reshape: NCHW is already (B, C, H*W)-contiguous.  No transpose pass.
    z3 = z_nchw.reshape(B, C, S)
    # Tiny grid-invariant side inputs (hoisted out of the per-tile body).
    emb_f32 = embedding.astype(jnp.float32)
    neg2e = -2.0 * emb_f32                                     # (n_e, e_dim)
    embT = jnp.transpose(emb_f32)                              # (e_dim, n_e)
    e_sq = jnp.sum(emb_f32 * emb_f32, axis=1, keepdims=True)   # (n_e, 1)

    kernel = functools.partial(_vq_kernel, s_total=S, needs_mask=needs_mask,
                               use_bf16=use_bf16_scores)

    # VMEM limit derived from the actual tile footprint (+25% and headroom),
    # never below the default scoped limit, never above ~90% of physical.
    const_bytes = 2 * (2 * n_e * e_dim * 4 + n_e * 128 * 4)
    io_bytes = 2 * (2 * C * ts * 4) + 2 * ts * 4 + 2 * ts * 4 + 2 * n_e * 4
    tmp_bytes = 5 * n_e * ts * 4 + 4 * C * ts * 4
    need = const_bytes + io_bytes + tmp_bytes
    vmem_limit = int(min(int(0.9 * vmem_cap),
                         max(32 << 20, need * 5 // 4 + (4 << 20))))

    zq3, idx4, esum4, ssep4 = pl.pallas_call(
        kernel,
        out_shape=(
            jax.ShapeDtypeStruct((B, C, S), z_nchw.dtype),        # z_q (NCHW-flat)
            jax.ShapeDtypeStruct((B, n_t, 1, ts), jnp.int32),     # indices
            jax.ShapeDtypeStruct((B, n_t, 1, n_e), jnp.float32),  # enc col-sum partials
            jax.ShapeDtypeStruct((B, n_t, 1, ts), jnp.float32),   # (zq-z)^2 partials
        ),
        grid_spec=pltpu.PrefetchScalarGridSpec(
            num_scalar_prefetch=0,
            grid=grid,
            in_specs=[
                pl.BlockSpec((1, C, ts), lambda b, i: (b, 0, i)),
                _const_spec((n_e, e_dim)),
                _const_spec((e_dim, n_e)),
                _const_spec((n_e, 1)),
            ],
            out_specs=[
                pl.BlockSpec((1, C, ts), lambda b, i: (b, 0, i)),
                pl.BlockSpec((1, 1, 1, ts), lambda b, i: (b, i, 0, 0)),
                pl.BlockSpec((1, 1, 1, n_e), lambda b, i: (b, i, 0, 0)),
                pl.BlockSpec((1, 1, 1, ts), lambda b, i: (b, i, 0, 0)),
            ],
        ),
        compiler_params=pltpu.CompilerParams(
            dimension_semantics=("parallel", "parallel"),
            vmem_limit_bytes=vmem_limit),
    )(z3, neg2e, embT, e_sq)

    # Free (contiguous) reshapes back to the module's return shapes.
    zq_nchw = zq3.reshape(B, C, H, W)
    idx_flat = idx4.reshape(B, n_t * ts)[:, :S].reshape(-1)
    min_encoding_indices = idx_flat.reshape(N, 1)

    # Tiny final reductions over the fused per-tile partials.
    mse = jnp.sum(ssep4) / (N * e_dim)
    # detach() only changes gradients; both loss terms share the forward value.
    loss = (1.0 + beta) * mse

    e_mean = jnp.sum(esum4.reshape(-1, n_e), axis=0) / N
    perplexity = jnp.exp(-jnp.sum(e_mean * jnp.log(e_mean + 1e-10)))

    # Lazily reconstruct the (N, n_e) one-hots only if asked for (they are
    # write-only API baggage for the loss/perplexity path).
    min_encodings = (jax.nn.one_hot(idx_flat, n_e, dtype=jnp.float32)
                     if return_encodings else None)

    # TODO(synk): straight-through estimator / detach() gradient semantics need
    # a custom_vjp; only forward values are produced here.
    return zq_nchw, loss, (perplexity, min_encodings, min_encoding_indices)


def _reference(z_nchw, embedding, beta):
    zt = jnp.transpose(z_nchw, (0, 2, 3, 1))
    zf = zt.reshape(-1, embedding.shape[1])
    d = (jnp.sum(zf ** 2, 1, keepdims=True) + jnp.sum(embedding ** 2, 1)
         - 2.0 * zf @ embedding.T)
    idx = jnp.argmin(d, axis=1)
    zq = embedding[idx].reshape(zt.shape)
    loss = jnp.mean((zq - zt) ** 2) * (1.0 + beta)
    e_mean = jnp.mean(jax.nn.one_hot(idx, embedding.shape[0]), axis=0)
    ppl = jnp.exp(-jnp.sum(e_mean * jnp.log(e_mean + 1e-10)))
    return jnp.transpose(zq, (0, 3, 1, 2)), loss, ppl, idx


if __name__ == "__main__":
    key = jax.random.PRNGKey(0)
    k1, k2 = jax.random.split(key)

    B, e_dim, H, W = 2, 4, 16, 16     # N = B*H*W = 512 rows
    n_e = 128
    beta = 0.25

    # deterministic "uniform_(-1/n_e, 1/n_e)" init for the embedding
    embedding = jax.random.uniform(
        k2, (n_e, e_dim), jnp.float32, minval=-1.0 / n_e, maxval=1.0 / n_e)
    z = jax.random.normal(k1, (B, e_dim, H, W), jnp.float32)

    zq, loss, (perplexity, enc, idx) = vector_quantize(z, embedding, beta)
    jax.block_until_ready((zq, loss, perplexity, enc, idx))

    # silent sanity check against a pure-JAX reference
    zq_ref, loss_ref, ppl_ref, idx_ref = _reference(z, embedding, beta)
    assert zq.shape == z.shape
    assert jnp.allclose(zq, zq_ref, atol=1e-5)
    assert jnp.allclose(loss, loss_ref, atol=1e-5)
    assert jnp.allclose(perplexity, ppl_ref, atol=1e-3)
    assert jnp.all(idx[:, 0] == idx_ref)
    assert enc.shape == (B * H * W, n_e) and enc.dtype == jnp.float32
    assert jnp.allclose(jnp.sum(enc, axis=1), 1.0)

    print("KERNEL_OK")
</pallas_src>

<mosaic_0001>
module attributes {stable_mosaic.version = 11 : i64} {
  func.func @_vq_kernel(%arg0: i32, %arg1: i32, %arg2: memref<1x4x256xf32, #tpu.memory_space<vmem>>, %arg3: memref<128x4xf32, #tpu.memory_space<vmem>>, %arg4: memref<4x128xf32, #tpu.memory_space<vmem>>, %arg5: memref<128x1xf32, #tpu.memory_space<vmem>>, %arg6: memref<1x4x256xf32, #tpu.memory_space<vmem>>, %arg7: memref<1x1x1x256xi32, #tpu.memory_space<vmem>>, %arg8: memref<1x1x1x128xf32, #tpu.memory_space<vmem>>, %arg9: memref<1x1x1x256xf32, #tpu.memory_space<vmem>>) attributes {dimension_semantics = [#tpu.dimension_semantics<parallel>, #tpu.dimension_semantics<parallel>], iteration_bounds = array<i64: 2, 1>, scalar_prefetch = 0 : i64, scratch_operands = 0 : i64, tpu.core_type = #tpu.core_type<tc>, window_params = [{transform_indices = @transform_0, window_bounds = array<i64: 1, 4, 256>}, {pipeline_mode = #tpu.pipeline_mode<synchronous>, transform_indices = @transform_1, window_bounds = array<i64: 128, 4>}, {pipeline_mode = #tpu.pipeline_mode<synchronous>, transform_indices = @transform_2, window_bounds = array<i64: 4, 128>}, {pipeline_mode = #tpu.pipeline_mode<synchronous>, transform_indices = @transform_3, window_bounds = array<i64: 128, 1>}, {transform_indices = @transform_4, window_bounds = array<i64: 1, 4, 256>}, {transform_indices = @transform_5, window_bounds = array<i64: 1, 1, 1, 256>}, {transform_indices = @transform_6, window_bounds = array<i64: 1, 1, 1, 128>}, {transform_indices = @transform_7, window_bounds = array<i64: 1, 1, 1, 256>}]} {
    %c0 = arith.constant 0 : index
    %c0_0 = arith.constant 0 : index
    %c0_1 = arith.constant 0 : index
    %0 = vector.load %arg2[%c0, %c0_0, %c0_1] : memref<1x4x256xf32, #tpu.memory_space<vmem>>, vector<1x4x256xf32>
    %1 = vector.shape_cast %0 : vector<1x4x256xf32> to vector<4x256xf32>
    %c0_2 = arith.constant 0 : index
    %c0_3 = arith.constant 0 : index
    %2 = vector.load %arg3[%c0_2, %c0_3] : memref<128x4xf32, #tpu.memory_space<vmem>>, vector<128x4xf32>
    %cst = arith.constant dense<0.000000e+00> : vector<128x256xf32>
    %3 = tpu.matmul %2, %1, %cst {dimension_numbers = #tpu.dot_dimension_numbers<[1], [0], [0], [1], [0, 0, 1, 1], [], []>} : vector<128x4xf32>, vector<4x256xf32>, vector<128x256xf32> -> vector<128x256xf32>
    %c0_4 = arith.constant 0 : index
    %c0_5 = arith.constant 0 : index
    %4 = vector.load %arg5[%c0_4, %c0_5] : memref<128x1xf32, #tpu.memory_space<vmem>>, vector<128x1xf32>
    %5 = vector.broadcast %4 : vector<128x1xf32> to vector<128x256xf32>
    %6 = arith.addf %5, %3 : vector<128x256xf32>
    %7 = tpu.iota {dimensions = array<i32: 0>} : vector<128x256xi32>
    %cst_6 = arith.constant dense<0x7F800000> : vector<256xf32>
    %8 = vector.multi_reduction <minimumf>, %6, %cst_6 [0] : vector<128x256xf32> to vector<256xf32>
    %9 = vector.shape_cast %8 : vector<256xf32> to vector<1x256xf32>
    %10 = vector.broadcast %9 : vector<1x256xf32> to vector<128x256xf32>
    %11 = arith.cmpf oeq, %6, %10 : vector<128x256xf32>
    %12 = arith.sitofp %7 : vector<128x256xi32> to vector<128x256xf32>
    %cst_7 = arith.constant 1.280000e+02 : f32
    %13 = vector.broadcast %cst_7 : f32 to vector<128x256xf32>
    %14 = arith.select %11, %12, %13 : vector<128x256xi1>, vector<128x256xf32>
    %cst_8 = arith.constant dense<0x7F800000> : vector<256xf32>
    %15 = vector.multi_reduction <minimumf>, %14, %cst_8 [0] : vector<128x256xf32> to vector<256xf32>
    %16 = arith.fptosi %15 : vector<256xf32> to vector<256xi32>
    %17 = vector.shape_cast %16 : vector<256xi32> to vector<1x256xi32>
    %18 = vector.broadcast %17 : vector<1x256xi32> to vector<128x256xi32>
    %19 = arith.cmpi eq, %7, %18 : vector<128x256xi32>
    %cst_9 = arith.constant 1.000000e+00 : f32
    %cst_10 = arith.constant 0.000000e+00 : f32
    %20 = vector.broadcast %cst_9 : f32 to vector<128x256xf32>
    %21 = vector.broadcast %cst_10 : f32 to vector<128x256xf32>
    %22 = arith.select %19, %20, %21 : vector<128x256xi1>, vector<128x256xf32>
    %c0_11 = arith.constant 0 : index
    %c0_12 = arith.constant 0 : index
    %23 = vector.load %arg4[%c0_11, %c0_12] : memref<4x128xf32, #tpu.memory_space<vmem>>, vector<4x128xf32>
    %cst_13 = arith.constant dense<0.000000e+00> : vector<4x256xf32>
    %24 = tpu.matmul %23, %22, %cst_13 {dimension_numbers = #tpu.dot_dimension_numbers<[1], [0], [0], [1], [0, 0, 1, 1], [], []>} : vector<4x128xf32>, vector<128x256xf32>, vector<4x256xf32> -> vector<4x256xf32>
    %25 = vector.shape_cast %24 : vector<4x256xf32> to vector<1x4x256xf32>
    %c0_14 = arith.constant 0 : index
    %c0_15 = arith.constant 0 : index
    %c0_16 = arith.constant 0 : index
    %26 = vector.load %arg6[%c0_14, %c0_15, %c0_16] : memref<1x4x256xf32, #tpu.memory_space<vmem>>, vector<1x4x256xf32>
    tpu.vector_store %arg6[%c0_14, %c0_15, %c0_16], %25 {strides = array<i32>} : memref<1x4x256xf32, #tpu.memory_space<vmem>>, vector<1x4x256xf32>,
    %27 = vector.shape_cast %16 : vector<256xi32> to vector<1x1x1x256xi32>
    %c0_17 = arith.constant 0 : index
    %c0_18 = arith.constant 0 : index
    %c0_19 = arith.constant 0 : index
    %c0_20 = arith.constant 0 : index
    %28 = vector.load %arg7[%c0_17, %c0_18, %c0_19, %c0_20] : memref<1x1x1x256xi32, #tpu.memory_space<vmem>>, vector<1x1x1x256xi32>
    tpu.vector_store %arg7[%c0_17, %c0_18, %c0_19, %c0_20], %27 {strides = array<i32>} : memref<1x1x1x256xi32, #tpu.memory_space<vmem>>, vector<1x1x1x256xi32>,
    %29 = arith.subf %24, %1 : vector<4x256xf32>
    %30 = arith.mulf %29, %29 : vector<4x256xf32>
    %cst_21 = arith.constant dense<0.000000e+00> : vector<256xf32>
    %31 = vector.multi_reduction <add>, %30, %cst_21 [0] : vector<4x256xf32> to vector<256xf32>
    %cst_22 = arith.constant dense<0.000000e+00> : vector<128xf32>
    %32 = vector.multi_reduction <add>, %22, %cst_22 [1] : vector<128x256xf32> to vector<128xf32>
    %33 = vector.shape_cast %32 : vector<128xf32> to vector<1x1x1x128xf32>
    %c0_23 = arith.constant 0 : index
    %c0_24 = arith.constant 0 : index
    %c0_25 = arith.constant 0 : index
    %c0_26 = arith.constant 0 : index
    %34 = vector.load %arg8[%c0_23, %c0_24, %c0_25, %c0_26] : memref<1x1x1x128xf32, #tpu.memory_space<vmem>>, vector<1x1x1x128xf32>
    tpu.vector_store %arg8[%c0_23, %c0_24, %c0_25, %c0_26], %33 {strides = array<i32>} : memref<1x1x1x128xf32, #tpu.memory_space<vmem>>, vector<1x1x1x128xf32>,
    %35 = vector.shape_cast %31 : vector<256xf32> to vector<1x1x1x256xf32>
    %c0_27 = arith.constant 0 : index
    %c0_28 = arith.constant 0 : index
    %c0_29 = arith.constant 0 : index
    %c0_30 = arith.constant 0 : index
    %36 = vector.load %arg9[%c0_27, %c0_28, %c0_29, %c0_30] : memref<1x1x1x256xf32, #tpu.memory_space<vmem>>, vector<1x1x1x256xf32>
    tpu.vector_store %arg9[%c0_27, %c0_28, %c0_29, %c0_30], %35 {strides = array<i32>} : memref<1x1x1x256xf32, #tpu.memory_space<vmem>>, vector<1x1x1x256xf32>,
    return
  }
  func.func @transform_0(%arg0: i32, %arg1: i32) -> (i32, i32, i32) {
    %c0_i32 = arith.constant 0 : i32
    %c0_i32_0 = arith.constant 0 : i32
    return %arg0, %c0_i32, %arg1 : i32, i32, i32
  }
  func.func @transform_1(%arg0: i32, %arg1: i32) -> (i32, i32) {
    %c0_i32 = arith.constant 0 : i32
    %c0_i32_0 = arith.constant 0 : i32
    %c0_i32_1 = arith.constant 0 : i32
    return %c0_i32, %c0_i32_0 : i32, i32
  }
  func.func @transform_2(%arg0: i32, %arg1: i32) -> (i32, i32) {
    %c0_i32 = arith.constant 0 : i32
    %c0_i32_0 = arith.constant 0 : i32
    %c0_i32_1 = arith.constant 0 : i32
    return %c0_i32, %c0_i32_0 : i32, i32
  }
  func.func @transform_3(%arg0: i32, %arg1: i32) -> (i32, i32) {
    %c0_i32 = arith.constant 0 : i32
    %c0_i32_0 = arith.constant 0 : i32
    %c0_i32_1 = arith.constant 0 : i32
    return %c0_i32, %c0_i32_0 : i32, i32
  }
  func.func @transform_4(%arg0: i32, %arg1: i32) -> (i32, i32, i32) {
    %c0_i32 = arith.constant 0 : i32
    %c0_i32_0 = arith.constant 0 : i32
    return %arg0, %c0_i32, %arg1 : i32, i32, i32
  }
  func.func @transform_5(%arg0: i32, %arg1: i32) -> (i32, i32, i32, i32) {
    %c0_i32 = arith.constant 0 : i32
    %c0_i32_0 = arith.constant 0 : i32
    %c0_i32_1 = arith.constant 0 : i32
    return %arg0, %arg1, %c0_i32, %c0_i32_0 : i32, i32, i32, i32
  }
  func.func @transform_6(%arg0: i32, %arg1: i32) -> (i32, i32, i32, i32) {
    %c0_i32 = arith.constant 0 : i32
    %c0_i32_0 = arith.constant 0 : i32
    %c0_i32_1 = arith.constant 0 : i32
    return %arg0, %arg1, %c0_i32, %c0_i32_0 : i32, i32, i32, i32
  }
  func.func @transform_7(%arg0: i32, %arg1: i32) -> (i32, i32, i32, i32) {
    %c0_i32 = arith.constant 0 : i32
    %c0_i32_0 = arith.constant 0 : i32
    %c0_i32_1 = arith.constant 0 : i32
    return %arg0, %arg1, %c0_i32, %c0_i32_0 : i32, i32, i32, i32
  }
}

</mosaic_0001>

<llo_original>
// kernel: tpu_custom_call.1
$region0: #{tpu_custom_call.1}
  #allocation0 [shape = 'u32[]', space=smem, size = 0x4, offset = 0x4, fixed_abs, tag = 'smem constant byte address 0x4 - core index']
  #allocation1 [shape = 'u32[144,128]{1,0:T(1,128)}', space=vmem, size = 0x12000, scoped, tag = 'internal scratch']
  %s0 = inlined_call_operand.vmem [shape: f32[2,4,256], index: 0, kind: input, shape index: {}]
  %s1 = inlined_call_operand.vmem [shape: f32[128,4], index: 1, kind: input, shape index: {}]
  %s2 = inlined_call_operand.vmem [shape: f32[4,128], index: 2, kind: input, shape index: {}]
  %s3 = inlined_call_operand.vmem [shape: f32[128,1], index: 3, kind: input, shape index: {}]
  %s4 = inlined_call_operand.hbm [shape: f32[2,4,256], index: 4, kind: output, shape index: {0}]
  %s5 = inlined_call_operand.hbm [shape: s32[2,1,1,256], index: 5, kind: output, shape index: {1}]
  %s6 = inlined_call_operand.hbm [shape: f32[2,1,1,128], index: 6, kind: output, shape index: {2}]
  %s7 = inlined_call_operand.hbm [shape: f32[2,1,1,256], index: 7, kind: output, shape index: {3}]
  %8 = xla_tuple %s4, %s5, %s6, %s7
  %s9 = sld [smem:[#allocation0]]
  $region73: #{tpu_custom_call.1} parent=0
    _
  %s11 = ssub.s32 1, %s9
  %s12 = scalar_select 0, %s11, %s9
  $region1: #{tpu_custom_call.1} parent=0
    #allocation2 [shape = 'u8[8192]{0}', space=vmem, size = 0x2000, scoped, tag = 'output window, operand 0']
    #allocation3 [shape = 's32[2]{0}', space=sflag, size = 0x8, scoped, tag = 'scoped memory for tpu_custom_call.1']
    #allocation4 [shape = 'u8[2048]{0}', space=vmem, size = 0x800, scoped, tag = 'output window, operand 1']
    #allocation5 [shape = 's32[2]{0}', space=sflag, size = 0x8, scoped, tag = 'scoped memory for tpu_custom_call.1']
    #allocation6 [shape = 'u8[1024]{0}', space=vmem, size = 0x400, scoped, tag = 'output window, operand 2']
    #allocation7 [shape = 'u8[2048]{0}', space=vmem, size = 0x800, scoped, tag = 'output window, operand 3']
    #allocation8 [shape = 's32[2]{0}', space=sflag, size = 0x8, scoped, tag = 'scoped memory for tpu_custom_call.1']
    %13 = vsyncpa [#allocation3], 0
    %s14 = scalar_lea.sflag [#allocation3], 1
    %15 = vsyncpa %s14, 0
    %16 = vsyncpa [#allocation5], 0
    %s17 = scalar_lea.sflag [#allocation5], 1
    %18 = vsyncpa %s17, 0
    %19 = vsyncpa [#allocation8], 0
    %s20 = scalar_lea.sflag [#allocation8], 1
    %21 = vsyncpa %s20, 0
    loop: start=0, step=1, limit=4
    $region2: #{tpu_custom_call.1} parent=1 // loop_pre_header
      _
    $region3: #{tpu_custom_call.1} parent=1 // loop_header
      %s23 = sphi 0, %s27
      %p24 = scmp.ge.s32.totalorder %s23, 4
      %s30 = sphi 0, %s42
      %s31 = sphi 0, %s38
      %s32 = sphi 0, %s30
      %s33 = sphi 0, %s31
      %s34 = sphi 0, %s32
      %s35 = sphi 0, %s33
      %s47 = sphi 0, %s49
      %s50 = sphi 0, %s47
      %s51 = sphi 0, %s50
      %s67 = sphi 0, %s51
      %s71 = sphi 0, %s71
      %s73 = sphi 0, %s71
      %s74 = sphi 0, %s73
      %s88 = sphi 0, %s74
      %s92 = sphi 0, %s92
      %s94 = sphi 0, %s92
      %s95 = sphi 0, %s94
      %s109 = sphi 0, %s95
      %s113 = sphi 0, %s113
      %s115 = sphi 0, %s113
      %s116 = sphi 0, %s115
      %s130 = sphi 0, %s116
      %s138 = sphi 0, %s140
      %s141 = sphi 0, %s138
      %s142 = sphi 0, %s141
      %s158 = sphi 0, %s142
      %s166 = sphi 0, %s168
      %s169 = sphi 0, %s166
      %s170 = sphi 0, %s169
      %s186 = sphi 0, %s170
      %s194 = sphi 0, %s196
      %s197 = sphi 0, %s194
      %s198 = sphi 0, %s197
      %s214 = sphi 0, %s198
      %s222 = sphi 0, %s224
      %s225 = sphi 0, %s222
      %s226 = sphi 0, %s225
      %s242 = sphi 0, %s226
    $region4: #{tpu_custom_call.1} parent=1 // loop_header_branch
      %26 = sbr.rel (%p24) target = $region8
    $region5: #{tpu_custom_call.1} parent=1 // loop_body
      %s28 = ssub.s32 %s23, 1
      %s29 = ssub.s32 %s23, 2
      %s36 = sadd.s32 1, %s31
      %p37 = scmp.ge.s32.totalorder %s36, 1
      %s38 = scalar_select %p37, 0, %s36
      %s39 = sadd.s32 1, %s30
      %s40 = scalar_select %p37, %s39, %s30
      %p41 = scmp.ge.s32.totalorder %s40, 2
      %s42 = scalar_select %p41, 0, %s40
      %s43 = ssub.s32 %s30, %s42
      %s44 = ssub.s32 %s31, %s38
      %s45 = sor.u32 %s43, %s44
      %p46 = scmp.eq.s32.totalorder %s45, 0
      %s48 = sadd.s32 %s47, 1
      %s49 = scalar_select %p46, %s47, %s48
      %p52 = pneg %p46
      %p53 = scmp.eq.s32.totalorder %s23, 1
      %p54 = por %p52, %p53
      %p55 = scmp.ne.s32.totalorder %s47, %s50
      %p56 = scmp.eq.s32.totalorder %s23, 0
      %p57 = por %p55, %p56
      %p58 = scmp.ne.s32.totalorder %s47, %s50
      %p59 = scmp.eq.s32.totalorder %s28, 1
      %p60 = por %p58, %p59
      %p61 = scmp.ne.s32.totalorder %s50, %s51
      %p62 = scmp.eq.s32.totalorder %s28, 0
      %p63 = por %p61, %p62
      %p64 = scmp.ne.s32.totalorder %s50, %s51
      %p65 = scmp.eq.s32.totalorder %s29, 1
      %p66 = por %p64, %p65
      %p68 = scmp.ne.s32.totalorder %s51, %s67
      %p69 = scmp.eq.s32.totalorder %s29, 0
      %p70 = por %p68, %p69
      %s72 = sadd.s32 %s71, 1
      %p75 = scmp.eq.s32.totalorder %s23, 1
      %p76 = scmp.ne.s32.totalorder %s71, %s73
      %p77 = scmp.eq.s32.totalorder %s23, 0
      %p78 = por %p76, %p77
      %p79 = scmp.ne.s32.totalorder %s71, %s73
      %p80 = scmp.eq.s32.totalorder %s28, 1
      %p81 = por %p79, %p80
      %p82 = scmp.ne.s32.totalorder %s73, %s74
      %p83 = scmp.eq.s32.totalorder %s28, 0
      %p84 = por %p82, %p83
      %p85 = scmp.ne.s32.totalorder %s73, %s74
      %p86 = scmp.eq.s32.totalorder %s29, 1
      %p87 = por %p85, %p86
      %p89 = scmp.ne.s32.totalorder %s74, %s88
      %p90 = scmp.eq.s32.totalorder %s29, 0
      %p91 = por %p89, %p90
      %s93 = sadd.s32 %s92, 1
      %p96 = scmp.eq.s32.totalorder %s23, 1
      %p97 = scmp.ne.s32.totalorder %s92, %s94
      %p98 = scmp.eq.s32.totalorder %s23, 0
      %p99 = por %p97, %p98
      %p100 = scmp.ne.s32.totalorder %s92, %s94
      %p101 = scmp.eq.s32.totalorder %s28, 1
      %p102 = por %p100, %p101
      %p103 = scmp.ne.s32.totalorder %s94, %s95
      %p104 = scmp.eq.s32.totalorder %s28, 0
      %p105 = por %p103, %p104
      %p106 = scmp.ne.s32.totalorder %s94, %s95
      %p107 = scmp.eq.s32.totalorder %s29, 1
      %p108 = por %p106, %p107
      %p110 = scmp.ne.s32.totalorder %s95, %s109
      %p111 = scmp.eq.s32.totalorder %s29, 0
      %p112 = por %p110, %p111
      %s114 = sadd.s32 %s113, 1
      %p117 = scmp.eq.s32.totalorder %s23, 1
      %p118 = scmp.ne.s32.totalorder %s113, %s115
      %p119 = scmp.eq.s32.totalorder %s23, 0
      %p120 = por %p118, %p119
      %p121 = scmp.ne.s32.totalorder %s113, %s115
      %p122 = scmp.eq.s32.totalorder %s28, 1
      %p123 = por %p121, %p122
      %p124 = scmp.ne.s32.totalorder %s115, %s116
      %p125 = scmp.eq.s32.totalorder %s28, 0
      %p126 = por %p124, %p125
      %p127 = scmp.ne.s32.totalorder %s115, %s116
      %p128 = scmp.eq.s32.totalorder %s29, 1
      %p129 = por %p127, %p128
      %p131 = scmp.ne.s32.totalorder %s116, %s130
      %p132 = scmp.eq.s32.totalorder %s29, 0
      %p133 = por %p131, %p132
      %s134 = ssub.s32 %s30, %s42
      %s135 = ssub.s32 %s31, %s38
      %s136 = sor.u32 %s134, %s135
      %p137 = scmp.eq.s32.totalorder %s136, 0
      %s139 = sadd.s32 %s138, 1
      %s140 = scalar_select %p137, %s138, %s139
      %p143 = pneg %p137
      %p144 = scmp.eq.s32.totalorder %s23, 1
      %p145 = por %p143, %p144
      %p146 = scmp.ne.s32.totalorder %s138, %s141
      %p147 = scmp.eq.s32.totalorder %s23, 0
      %p148 = por %p146, %p147
      %p149 = scmp.ne.s32.totalorder %s138, %s141
      %p150 = scmp.eq.s32.totalorder %s28, 1
      %p151 = por %p149, %p150
      %p152 = scmp.ne.s32.totalorder %s141, %s142
      %p153 = scmp.eq.s32.totalorder %s28, 0
      %p154 = por %p152, %p153
      %p155 = scmp.ne.s32.totalorder %s141, %s142
      %p156 = scmp.eq.s32.totalorder %s29, 1
      %p157 = por %p155, %p156
      %p159 = scmp.ne.s32.totalorder %s142, %s158
      %p160 = scmp.eq.s32.totalorder %s29, 0
      %p161 = por %p159, %p160
      %s162 = ssub.s32 %s30, %s42
      %s163 = ssub.s32 %s31, %s38
      %s164 = sor.u32 %s162, %s163
      %p165 = scmp.eq.s32.totalorder %s164, 0
      %s167 = sadd.s32 %s166, 1
      %s168 = scalar_select %p165, %s166, %s167
      %p171 = pneg %p165
      %p172 = scmp.eq.s32.totalorder %s23, 1
      %p173 = por %p171, %p172
      %p174 = scmp.ne.s32.totalorder %s166, %s169
      %p175 = scmp.eq.s32.totalorder %s23, 0
      %p176 = por %p174, %p175
      %p177 = scmp.ne.s32.totalorder %s166, %s169
      %p178 = scmp.eq.s32.totalorder %s28, 1
      %p179 = por %p177, %p178
      %p180 = scmp.ne.s32.totalorder %s169, %s170
      %p181 = scmp.eq.s32.totalorder %s28, 0
      %p182 = por %p180, %p181
      %p183 = scmp.ne.s32.totalorder %s169, %s170
      %p184 = scmp.eq.s32.totalorder %s29, 1
      %p185 = por %p183, %p184
      %p187 = scmp.ne.s32.totalorder %s170, %s186
      %p188 = scmp.eq.s32.totalorder %s29, 0
      %p189 = por %p187, %p188
      %s190 = ssub.s32 %s30, %s42
      %s191 = ssub.s32 %s31, %s38
      %s192 = sor.u32 %s190, %s191
      %p193 = scmp.eq.s32.totalorder %s192, 0
      %s195 = sadd.s32 %s194, 1
      %s196 = scalar_select %p193, %s194, %s195
      %p199 = pneg %p193
      %p200 = scmp.eq.s32.totalorder %s23, 1
      %p201 = por %p199, %p200
      %p202 = scmp.ne.s32.totalorder %s194, %s197
      %p203 = scmp.eq.s32.totalorder %s23, 0
      %p204 = por %p202, %p203
      %p205 = scmp.ne.s32.totalorder %s194, %s197
      %p206 = scmp.eq.s32.totalorder %s28, 1
      %p207 = por %p205, %p206
      %p208 = scmp.ne.s32.totalorder %s197, %s198
      %p209 = scmp.eq.s32.totalorder %s28, 0
      %p210 = por %p208, %p209
      %p211 = scmp.ne.s32.totalorder %s197, %s198
      %p212 = scmp.eq.s32.totalorder %s29, 1
      %p213 = por %p211, %p212
      %p215 = scmp.ne.s32.totalorder %s198, %s214
      %p216 = scmp.eq.s32.totalorder %s29, 0
      %p217 = por %p215, %p216
      %s218 = ssub.s32 %s30, %s42
      %s219 = ssub.s32 %s31, %s38
      %s220 = sor.u32 %s218, %s219
      %p221 = scmp.eq.s32.totalorder %s220, 0
      %s223 = sadd.s32 %s222, 1
      %s224 = scalar_select %p221, %s222, %s223
      %p227 = pneg %p221
      %p228 = scmp.eq.s32.totalorder %s23, 1
      %p229 = por %p227, %p228
      %p230 = scmp.ne.s32.totalorder %s222, %s225
      %p231 = scmp.eq.s32.totalorder %s23, 0
      %p232 = por %p230, %p231
      %p233 = scmp.ne.s32.totalorder %s222, %s225
      %p234 = scmp.eq.s32.totalorder %s28, 1
      %p235 = por %p233, %p234
      %p236 = scmp.ne.s32.totalorder %s225, %s226
      %p237 = scmp.eq.s32.totalorder %s28, 0
      %p238 = por %p236, %p237
      %p239 = scmp.ne.s32.totalorder %s225, %s226
      %p240 = scmp.eq.s32.totalorder %s29, 1
      %p241 = por %p239, %p240
      %p243 = scmp.ne.s32.totalorder %s226, %s242
      %p244 = scmp.eq.s32.totalorder %s29, 0
      %p245 = por %p243, %p244
      %p246 = scmp.le.s32.totalorder 1, %s23
      %p247 = scmp.lt.s32.totalorder %s23, 3
      %p248 = pnand %p246, %p247
      %p249 = pneg %p248
      // Predicated region
      $region9: #{tpu_custom_call.1} parent=5 // pred_check
        _
      $region10: #{tpu_custom_call.1} parent=5 // pred_check_branch
        %251 = sbr.rel (%p248) target = $region12
      $region11: #{tpu_custom_call.1} parent=5 // pred_region
        %s252 = ssub.s32 %s23, 1
        // Predicated region
        $region13: #{tpu_custom_call.1} parent=11 // pred_check
          %p253 = pneg %p84
        $region14: #{tpu_custom_call.1} parent=11 // pred_check_branch
          %255 = sbr.rel (%p253) target = $region16
        $region15: #{tpu_custom_call.1} parent=11 // pred_region
          _
        $region16: #{tpu_custom_call.1} parent=11 // pred_fallthru
          _
        // Predicated region
        $region17: #{tpu_custom_call.1} parent=11 // pred_check
          %p256 = pneg %p105
        $region18: #{tpu_custom_call.1} parent=11 // pred_check_branch
          %258 = sbr.rel (%p256) target = $region20
        $region19: #{tpu_custom_call.1} parent=11 // pred_region
          _
        $region20: #{tpu_custom_call.1} parent=11 // pred_fallthru
          _
        // Predicated region
        $region21: #{tpu_custom_call.1} parent=11 // pred_check
          %p259 = pneg %p126
        $region22: #{tpu_custom_call.1} parent=11 // pred_check_branch
          %261 = sbr.rel (%p259) target = $region24
        $region23: #{tpu_custom_call.1} parent=11 // pred_region
          _
        $region24: #{tpu_custom_call.1} parent=11 // pred_fallthru
          _
      $region12: #{tpu_custom_call.1} parent=5 // pred_fallthru
        _
      %p262 = scmp.lt.s32.totalorder %s23, 2
      // Predicated region
      $region25: #{tpu_custom_call.1} parent=5 // pred_check
        %p263 = pneg %p262
      $region26: #{tpu_custom_call.1} parent=5 // pred_check_branch
        %265 = sbr.rel (%p263) target = $region28
      $region27: #{tpu_custom_call.1} parent=5 // pred_region
        // Predicated region
        $region29: #{tpu_custom_call.1} parent=27 // pred_check
          %p266 = pneg %p57
        $region30: #{tpu_custom_call.1} parent=27 // pred_check_branch
          %268 = sbr.rel (%p266) target = $region32
        $region31: #{tpu_custom_call.1} parent=27 // pred_region
          %s269 = smul.u32 2, %s31
          %p270 = scmp.lt.s32.totalorder %s30, 1
          %s271 = scalar_select %p270, %s30, 1
          %p272 = scmp.lt.s32.totalorder %s269, 1
          %s273 = scalar_select %p272, %s269, 1
          %s274 = smul.addr %s271, 2
          %s275 = sadd.s32 %s273, %s274
          %s276 = smul.addr %s275, 4
          %s277 = scalar_lea.vmem %s0, %s276
          %s278 = smul.u32 2, %s31
        $region32: #{tpu_custom_call.1} parent=27 // pred_fallthru
          _
      $region28: #{tpu_custom_call.1} parent=5 // pred_fallthru
        _
      %p279 = scmp.le.s32.totalorder 1, %s23
      %p280 = scmp.lt.s32.totalorder %s23, 3
      %p281 = pnand %p279, %p280
      %p282 = pneg %p281
      // Predicated region
      $region33: #{tpu_custom_call.1} parent=5 // pred_check
        _
      $region34: #{tpu_custom_call.1} parent=5 // pred_check_branch
        %284 = sbr.rel (%p281) target = $region36
      $region35: #{tpu_custom_call.1} parent=5 // pred_region
        %s285 = ssub.s32 %s23, 1
        %s286 = smul.u32 2, %s33
        %p287 = scmp.lt.s32.totalorder %s32, 1
        %s288 = scalar_select %p287, %s32, 1
        %p289 = scmp.lt.s32.totalorder %s286, 1
        %s290 = scalar_select %p289, %s286, 1
        %s291 = smul.addr %s288, 2
        %s292 = sadd.s32 %s290, %s291
        %s293 = smul.addr %s292, 4
        %s294 = scalar_lea.vmem %s0, %s293
        %p295 = pneg %p63
        %p296 = pneg %p60
        %p297 = pneg %p84
        %p298 = pneg %p81
        %p299 = pneg %p105
        %p300 = pneg %p102
        %p301 = pneg %p126
        %p302 = pneg %p123
        %p303 = pneg %p154
        %p304 = pneg %p151
        %s305 = sand.u32 %s141, 1
        %s306 = scalar_lea.sflag [#allocation3], %s305
        %s307 = sand.u32 %s141, 1
        %s308 = smul.addr %s307, 8
        %s309 = scalar_lea.vmem [#allocation2], %s308
        %p310 = pneg %p182
        %p311 = pneg %p179
        %s312 = sand.u32 %s28, 1
        %s313 = scalar_lea.sflag [#allocation5], %s312
        %s314 = sand.u32 %s169, 1
        %s315 = smul.addr %s314, 2
        %s316 = scalar_lea.vmem [#allocation4], %s315
        %p317 = pneg %p210
        %p318 = pneg %p207
        %s319 = sand.u32 %s28, 1
        %s320 = scalar_lea.sflag [#allocation5], %s319
        %s321 = sand.u32 %s197, 1
        %s322 = scalar_lea.vmem [#allocation6], %s321
        %p323 = pneg %p238
        %p324 = pneg %p235
        %s325 = sand.u32 %s225, 1
        %s326 = scalar_lea.sflag [#allocation8], %s325
        %s327 = sand.u32 %s225, 1
        %s328 = smul.addr %s327, 2
        %s329 = scalar_lea.vmem [#allocation7], %s328
        %s330 = smul.u32 2, %s33
        %p331 = scmp.lt.s32.totalorder %s32, 1
        %s332 = scalar_select %p331, %s32, 1
        %p333 = scmp.lt.s32.totalorder %s330, 1
        %s334 = scalar_select %p333, %s330, 1
        %s335 = smul.addr %s332, 2
        %s336 = sadd.s32 %s334, %s335
        %s337 = smul.addr %s336, 4
        %s338 = scalar_lea.vmem %s0, %s337
        %s339 = smul.u32 2, %s33
        %s340 = smul.u32 2, %s33
        %v341 = vld [vmem:[%s338] sm:$0xff]
        %v342 = vld [vmem:[%s1] sm:$0xff]
        %v343 = vld [vmem:[%s1 + $0x8] sm:$0xff]
        %v344 = vld [vmem:[%s1 + $0x10] sm:$0xff]
        %v345 = vld [vmem:[%s1 + $0x18] sm:$0xff]
        %v346 = vld [vmem:[%s1 + $0x20] sm:$0xff]
        %v347 = vld [vmem:[%s1 + $0x28] sm:$0xff]
        %v348 = vld [vmem:[%s1 + $0x30] sm:$0xff]
        %v349 = vld [vmem:[%s1 + $0x38] sm:$0xff]
        %v350 = vld [vmem:[%s1 + $0x40] sm:$0xff]
        %v351 = vld [vmem:[%s1 + $0x48] sm:$0xff]
        %v352 = vld [vmem:[%s1 + $0x50] sm:$0xff]
        %v353 = vld [vmem:[%s1 + $0x58] sm:$0xff]
        %v354 = vld [vmem:[%s1 + $0x60] sm:$0xff]
        %v355 = vld [vmem:[%s1 + $0x68] sm:$0xff]
        %v356 = vld [vmem:[%s1 + $0x70] sm:$0xff]
        %v357 = vld [vmem:[%s1 + $0x78] sm:$0xff]
        %v359 = vcombine.high %v341, %v341
        %vm360 = vcmask 31744
        %v362 = vsel %vm360, %v342, 0
        %v365 = vsel %vm360, %v343, 0
        %v368 = vsel %vm360, %v344, 0
        %v371 = vsel %vm360, %v345, 0
        %v374 = vsel %vm360, %v346, 0
        %v377 = vsel %vm360, %v347, 0
        %v380 = vsel %vm360, %v348, 0
        %v383 = vsel %vm360, %v349, 0
        %v386 = vsel %vm360, %v350, 0
        %v389 = vsel %vm360, %v351, 0
        %v392 = vsel %vm360, %v352, 0
        %v395 = vsel %vm360, %v353, 0
        %v398 = vsel %vm360, %v354, 0
        %v401 = vsel %vm360, %v355, 0
        %v404 = vsel %vm360, %v356, 0
        %v407 = vsel %vm360, %v357, 0
        %vm409 = vcmask 1043456
        %v410 = vsel %vm409, %v341, 0
        %v412 = vsel %vm409, %v359, 0
        %414 = vmatprep.subr.mxu0 %v412
        %415 = vmatpush1.msra.mxu0 %v410
        %416 = vmatprep.subr.mxu0 0.0
        %417 = vmatpush1.msra.mxu0 0.0
        %418 = vmatprep.subr.mxu0 0.0
        %419 = vmatpush1.msra.mxu0 0.0
        %420 = vmatprep.subr.mxu0 0.0
        %421 = vmatpush1.msra.mxu0 0.0
        %422 = vmatprep.subr.mxu0 0.0
        %423 = vmatpush1.msra.mxu0 0.0
        %424 = vmatprep.subr.mxu0 0.0
        %425 = vmatpush1.msra.mxu0 0.0
        %426 = vmatprep.subr.mxu0 0.0
        %427 = vmatpush1.msra.mxu0 0.0
        %428 = vmatprep.subr.mxu0 0.0
        %429 = vmatpush1.msra.mxu0 0.0
        %430 = vmatprep.subr.mxu0 0.0
        %431 = vmatpush1.msra.mxu0 0.0
        %432 = vmatprep.subr.mxu0 0.0
        %433 = vmatpush1.msra.mxu0 0.0
        %434 = vmatprep.subr.mxu0 0.0
        %435 = vmatpush1.msra.mxu0 0.0
        %436 = vmatprep.subr.mxu0 0.0
        %437 = vmatpush1.msra.mxu0 0.0
        %438 = vmatprep.subr.mxu0 0.0
        %439 = vmatpush1.msra.mxu0 0.0
        %440 = vmatprep.subr.mxu0 0.0
        %441 = vmatpush1.msra.mxu0 0.0
        %442 = vmatprep.subr.mxu0 0.0
        %443 = vmatpush1.msra.mxu0 0.0
        %444 = vmatprep.subr.mxu0 0.0
        %445 = vmatpush1.msra.mxu0 0.0
        %446 = vmatprep.subr.mxu0 0.0
        %447 = vmatpush1.msra.mxu0 0.0
        %448 = vmatprep.subr.mxu0 0.0
        %449 = vmatpush1.msra.mxu0 0.0
        %450 = vmatprep.subr.mxu0 0.0
        %451 = vmatpush1.msra.mxu0 0.0
        %452 = vmatprep.subr.mxu0 0.0
        %453 = vmatpush1.msra.mxu0 0.0
        %454 = vmatprep.subr.mxu0 0.0
        %455 = vmatpush1.msra.mxu0 0.0
        %456 = vmatprep.subr.mxu0 0.0
        %457 = vmatpush1.msra.mxu0 0.0
        %458 = vmatprep.subr.mxu0 0.0
        %459 = vmatpush1.msra.mxu0 0.0
        %460 = vmatprep.subr.mxu0 0.0
        %461 = vmatpush1.msra.mxu0 0.0
        %462 = vmatprep.subr.mxu0 0.0
        %463 = vmatpush1.msra.mxu0 0.0
        %464 = vmatprep.subr.mxu0 0.0
        %465 = vmatpush1.msra.mxu0 0.0
        %466 = vmatprep.subr.mxu0 0.0
        %467 = vmatpush1.msra.mxu0 0.0
        %468 = vmatprep.subr.mxu0 0.0
        %469 = vmatpush1.msra.mxu0 0.0
        %470 = vmatprep.subr.mxu0 0.0
        %471 = vmatpush1.msra.mxu0 0.0
        %472 = vmatprep.subr.mxu0 0.0
        %473 = vmatpush1.msra.mxu0 0.0
        %474 = vmatprep.subr.mxu0 0.0
        %475 = vmatpush1.msra.mxu0 0.0
        %476 = vmatprep.subr.mxu0 0.0
        %477 = vmatpush1.msra.mxu0 0.0
        %478 = vmatprep.mubr.f32.mxu0 0.0
        %479 = vmatmul.mubr.f32.gmra.mrb[0].mxu0 %v362
        %v480 = vpop.f32.mrb[0].mxu0
        %v481 = vadd.f32 0.0, %v480
        %v482 = vpop.f32.mrb[0].mxu0
        %v483 = vadd.f32 0.0, %v482
        %484 = vmatprep.mubr.f32.mxu0 0.0
        %485 = vmatmul.mubr.f32.gmra.mrb[0].mxu0 %v365
        %v486 = vpop.f32.mrb[0].mxu0
        %v487 = vadd.f32 0.0, %v486
        %v488 = vpop.f32.mrb[0].mxu0
        %v489 = vadd.f32 0.0, %v488
        %490 = vmatprep.mubr.f32.mxu0 0.0
        %491 = vmatmul.mubr.f32.gmra.mrb[0].mxu0 %v368
        %v492 = vpop.f32.mrb[0].mxu0
        %v493 = vadd.f32 0.0, %v492
        %v494 = vpop.f32.mrb[0].mxu0
        %v495 = vadd.f32 0.0, %v494
        %496 = vmatprep.mubr.f32.mxu0 0.0
        %497 = vmatmul.mubr.f32.gmra.mrb[0].mxu0 %v371
        %v498 = vpop.f32.mrb[0].mxu0
        %v499 = vadd.f32 0.0, %v498
        %v500 = vpop.f32.mrb[0].mxu0
        %v501 = vadd.f32 0.0, %v500
        %502 = vmatprep.mubr.f32.mxu0 0.0
        %503 = vmatmul.mubr.f32.gmra.mrb[0].mxu0 %v374
        %v504 = vpop.f32.mrb[0].mxu0
        %v505 = vadd.f32 0.0, %v504
        %v506 = vpop.f32.mrb[0].mxu0
        %v507 = vadd.f32 0.0, %v506
        %508 = vmatprep.mubr.f32.mxu0 0.0
        %509 = vmatmul.mubr.f32.gmra.mrb[0].mxu0 %v377
        %v510 = vpop.f32.mrb[0].mxu0
        %v511 = vadd.f32 0.0, %v510
        %v512 = vpop.f32.mrb[0].mxu0
        %v513 = vadd.f32 0.0, %v512
        %514 = vmatprep.mubr.f32.mxu0 0.0
        %515 = vmatmul.mubr.f32.gmra.mrb[0].mxu0 %v380
        %v516 = vpop.f32.mrb[0].mxu0
        %v517 = vadd.f32 0.0, %v516
        %v518 = vpop.f32.mrb[0].mxu0
        %v519 = vadd.f32 0.0, %v518
        %520 = vmatprep.mubr.f32.mxu0 0.0
        %521 = vmatmul.mubr.f32.gmra.mrb[0].mxu0 %v383
        %v522 = vpop.f32.mrb[0].mxu0
        %v523 = vadd.f32 0.0, %v522
        %v524 = vpop.f32.mrb[0].mxu0
        %v525 = vadd.f32 0.0, %v524
        %526 = vmatprep.mubr.f32.mxu0 0.0
        %527 = vmatmul.mubr.f32.gmra.mrb[0].mxu0 %v386
        %v528 = vpop.f32.mrb[0].mxu0
        %v529 = vadd.f32 0.0, %v528
        %v530 = vpop.f32.mrb[0].mxu0
        %v531 = vadd.f32 0.0, %v530
        %532 = vmatprep.mubr.f32.mxu0 0.0
        %533 = vmatmul.mubr.f32.gmra.mrb[0].mxu0 %v389
        %v534 = vpop.f32.mrb[0].mxu0
        %v535 = vadd.f32 0.0, %v534
        %v536 = vpop.f32.mrb[0].mxu0
        %v537 = vadd.f32 0.0, %v536
        %538 = vmatprep.mubr.f32.mxu0 0.0
        %539 = vmatmul.mubr.f32.gmra.mrb[0].mxu0 %v392
        %v540 = vpop.f32.mrb[0].mxu0
        %v541 = vadd.f32 0.0, %v540
        %v542 = vpop.f32.mrb[0].mxu0
        %v543 = vadd.f32 0.0, %v542
        %544 = vmatprep.mubr.f32.mxu0 0.0
        %545 = vmatmul.mubr.f32.gmra.mrb[0].mxu0 %v395
        %v546 = vpop.f32.mrb[0].mxu0
        %v547 = vadd.f32 0.0, %v546
        %v548 = vpop.f32.mrb[0].mxu0
        %v549 = vadd.f32 0.0, %v548
        %550 = vmatprep.mubr.f32.mxu0 0.0
        %551 = vmatmul.mubr.f32.gmra.mrb[0].mxu0 %v398
        %v552 = vpop.f32.mrb[0].mxu0
        %v553 = vadd.f32 0.0, %v552
        %v554 = vpop.f32.mrb[0].mxu0
        %v555 = vadd.f32 0.0, %v554
        %556 = vmatprep.mubr.f32.mxu0 0.0
        %557 = vmatmul.mubr.f32.gmra.mrb[0].mxu0 %v401
        %v558 = vpop.f32.mrb[0].mxu0
        %v559 = vadd.f32 0.0, %v558
        %v560 = vpop.f32.mrb[0].mxu0
        %v561 = vadd.f32 0.0, %v560
        %562 = vmatprep.mubr.f32.mxu0 0.0
        %563 = vmatmul.mubr.f32.gmra.mrb[0].mxu0 %v404
        %v564 = vpop.f32.mrb[0].mxu0
        %v565 = vadd.f32 0.0, %v564
        %v566 = vpop.f32.mrb[0].mxu0
        %v567 = vadd.f32 0.0, %v566
        %568 = vmatprep.mubr.f32.mxu0 0.0
        %569 = vmatmul.mubr.f32.gmra.mrb[0].mxu0 %v407
        %v570 = vpop.f32.mrb[0].mxu0
        %v571 = vadd.f32 0.0, %v570
        %v572 = vpop.f32.mrb[0].mxu0
        %v573 = vadd.f32 0.0, %v572
        %574 = vdwg.mxu0
        %v575 = vld [vmem:[%s3] sm:$0xff]
        %v576 = vld [vmem:[%s3 + $0x8] sm:$0xff]
        %v577 = vld [vmem:[%s3 + $0x10] sm:$0xff]
        %v578 = vld [vmem:[%s3 + $0x18] sm:$0xff]
        %v579 = vld [vmem:[%s3 + $0x20] sm:$0xff]
        %v580 = vld [vmem:[%s3 + $0x28] sm:$0xff]
        %v581 = vld [vmem:[%s3 + $0x30] sm:$0xff]
        %v582 = vld [vmem:[%s3 + $0x38] sm:$0xff]
        %v583 = vld [vmem:[%s3 + $0x40] sm:$0xff]
        %v584 = vld [vmem:[%s3 + $0x48] sm:$0xff]
        %v585 = vld [vmem:[%s3 + $0x50] sm:$0xff]
        %v586 = vld [vmem:[%s3 + $0x58] sm:$0xff]
        %v587 = vld [vmem:[%s3 + $0x60] sm:$0xff]
        %v588 = vld [vmem:[%s3 + $0x68] sm:$0xff]
        %v589 = vld [vmem:[%s3 + $0x70] sm:$0xff]
        %v590 = vld [vmem:[%s3 + $0x78] sm:$0xff]
        %592 = vset.pattern.permute.xlu0 0
        %593 = vperm.xlu0 %592, %v575
        %v594 = vpop.permute.xlu0 %593
        %597 = vset.pattern.permute.xlu0 0
        %598 = vperm.xlu0 %597, %v576
        %v599 = vpop.permute.xlu0 %598
        %602 = vset.pattern.permute.xlu0 0
        %603 = vperm.xlu0 %602, %v577
        %v604 = vpop.permute.xlu0 %603
        %607 = vset.pattern.permute.xlu0 0
        %608 = vperm.xlu0 %607, %v578
        %v609 = vpop.permute.xlu0 %608
        %612 = vset.pattern.permute.xlu0 0
        %613 = vperm.xlu0 %612, %v579
        %v614 = vpop.permute.xlu0 %613
        %617 = vset.pattern.permute.xlu0 0
        %618 = vperm.xlu0 %617, %v580
        %v619 = vpop.permute.xlu0 %618
        %622 = vset.pattern.permute.xlu0 0
        %623 = vperm.xlu0 %622, %v581
        %v624 = vpop.permute.xlu0 %623
        %627 = vset.pattern.permute.xlu0 0
        %628 = vperm.xlu0 %627, %v582
        %v629 = vpop.permute.xlu0 %628
        %632 = vset.pattern.permute.xlu0 0
        %633 = vperm.xlu0 %632, %v583
        %v634 = vpop.permute.xlu0 %633
        %637 = vset.pattern.permute.xlu0 0
        %638 = vperm.xlu0 %637, %v584
        %v639 = vpop.permute.xlu0 %638
        %642 = vset.pattern.permute.xlu0 0
        %643 = vperm.xlu0 %642, %v585
        %v644 = vpop.permute.xlu0 %643
        %647 = vset.pattern.permute.xlu0 0
        %648 = vperm.xlu0 %647, %v586
        %v649 = vpop.permute.xlu0 %648
        %652 = vset.pattern.permute.xlu0 0
        %653 = vperm.xlu0 %652, %v587
        %v654 = vpop.permute.xlu0 %653
        %657 = vset.pattern.permute.xlu0 0
        %658 = vperm.xlu0 %657, %v588
        %v659 = vpop.permute.xlu0 %658
        %662 = vset.pattern.permute.xlu0 0
        %663 = vperm.xlu0 %662, %v589
        %v664 = vpop.permute.xlu0 %663
        %667 = vset.pattern.permute.xlu0 0
        %668 = vperm.xlu0 %667, %v590
        %v669 = vpop.permute.xlu0 %668
        %v671 = vadd.f32 %v594, %v481
        %v672 = vadd.f32 %v594, %v483
        %v673 = vadd.f32 %v599, %v487
        %v674 = vadd.f32 %v599, %v489
        %v675 = vadd.f32 %v604, %v493
        %v676 = vadd.f32 %v604, %v495
        %v677 = vadd.f32 %v609, %v499
        %v678 = vadd.f32 %v609, %v501
        %v679 = vadd.f32 %v614, %v505
        %v680 = vadd.f32 %v614, %v507
        %v681 = vadd.f32 %v619, %v511
        %v682 = vadd.f32 %v619, %v513
        %v683 = vadd.f32 %v624, %v517
        %v684 = vadd.f32 %v624, %v519
        %v685 = vadd.f32 %v629, %v523
        %v686 = vadd.f32 %v629, %v525
        %v687 = vadd.f32 %v634, %v529
        %v688 = vadd.f32 %v634, %v531
        %v689 = vadd.f32 %v639, %v535
        %v690 = vadd.f32 %v639, %v537
        %v691 = vadd.f32 %v644, %v541
        %v692 = vadd.f32 %v644, %v543
        %v693 = vadd.f32 %v649, %v547
        %v694 = vadd.f32 %v649, %v549
        %v695 = vadd.f32 %v654, %v553
        %v696 = vadd.f32 %v654, %v555
        %v697 = vadd.f32 %v659, %v559
        %v698 = vadd.f32 %v659, %v561
        %v699 = vadd.f32 %v664, %v565
        %v700 = vadd.f32 %v664, %v567
        %v701 = vadd.f32 %v669, %v571
        %v702 = vadd.f32 %v669, %v573
        %v703 = vlaneseq
        %v704 = vshrl.u32 %v703, 7
        %v705 = vadd.s32 %v704, 8
        %v706 = vadd.s32 %v704, 16
        %v707 = vadd.s32 %v704, 24
        %v708 = vadd.s32 %v704, 32
        %v709 = vadd.s32 %v704, 40
        %v710 = vadd.s32 %v704, 48
        %v711 = vadd.s32 %v704, 56
        %v712 = vadd.s32 %v704, 64
        %v713 = vadd.s32 %v704, 72
        %v714 = vadd.s32 %v704, 80
        %v715 = vadd.s32 %v704, 88
        %v716 = vadd.s32 %v704, 96
        %v717 = vadd.s32 %v704, 104
        %v718 = vadd.s32 %v704, 112
        %v719 = vadd.s32 %v704, 120
        %v720 = vmin.f32 %v671, %v675
        %v721 = vmin.f32 %v673, %v677
        %v722 = vmin.f32 %v720, %v679
        %v723 = vmin.f32 %v721, %v681
        %v724 = vmin.f32 %v722, %v683
        %v725 = vmin.f32 %v723, %v685
        %v726 = vmin.f32 %v724, %v687
        %v727 = vmin.f32 %v725, %v689
        %v728 = vmin.f32 %v726, %v691
        %v729 = vmin.f32 %v727, %v693
        %v730 = vmin.f32 %v728, %v695
        %v731 = vmin.f32 %v729, %v697
        %v732 = vmin.f32 %v730, %v699
        %v733 = vmin.f32 %v731, %v701
        %v734 = vmin.f32 %v732, %v733
        %v735 = vrot.slane %v734, 4
        %v736 = vmin.f32 %v734, %v735
        %v737 = vrot.slane %v736, 2
        %v738 = vmin.f32 %v736, %v737
        %v739 = vrot.slane %v738, 1
        %v740 = vmin.f32 %v738, %v739
        %v741 = vmin.f32 %v672, %v676
        %v742 = vmin.f32 %v674, %v678
        %v743 = vmin.f32 %v741, %v680
        %v744 = vmin.f32 %v742, %v682
        %v745 = vmin.f32 %v743, %v684
        %v746 = vmin.f32 %v744, %v686
        %v747 = vmin.f32 %v745, %v688
        %v748 = vmin.f32 %v746, %v690
        %v749 = vmin.f32 %v747, %v692
        %v750 = vmin.f32 %v748, %v694
        %v751 = vmin.f32 %v749, %v696
        %v752 = vmin.f32 %v750, %v698
        %v753 = vmin.f32 %v751, %v700
        %v754 = vmin.f32 %v752, %v702
        %v755 = vmin.f32 %v753, %v754
        %v756 = vrot.slane %v755, 4
        %v757 = vmin.f32 %v755, %v756
        %v758 = vrot.slane %v757, 2
        %v759 = vmin.f32 %v757, %v758
        %v760 = vrot.slane %v759, 1
        %v761 = vmin.f32 %v759, %v760
        %vm762 = vcmp.eq.f32.partialorder %v671, %v740
        %vm763 = vcmp.eq.f32.partialorder %v672, %v761
        %vm764 = vcmp.eq.f32.partialorder %v673, %v740
        %vm765 = vcmp.eq.f32.partialorder %v674, %v761
        %vm766 = vcmp.eq.f32.partialorder %v675, %v740
        %vm767 = vcmp.eq.f32.partialorder %v676, %v761
        %vm768 = vcmp.eq.f32.partialorder %v677, %v740
        %vm769 = vcmp.eq.f32.partialorder %v678, %v761
        %vm770 = vcmp.eq.f32.partialorder %v679, %v740
        %vm771 = vcmp.eq.f32.partialorder %v680, %v761
        %vm772 = vcmp.eq.f32.partialorder %v681, %v740
        %vm773 = vcmp.eq.f32.partialorder %v682, %v761
        %vm774 = vcmp.eq.f32.partialorder %v683, %v740
        %vm775 = vcmp.eq.f32.partialorder %v684, %v761
        %vm776 = vcmp.eq.f32.partialorder %v685, %v740
        %vm777 = vcmp.eq.f32.partialorder %v686, %v761
        %vm778 = vcmp.eq.f32.partialorder %v687, %v740
        %vm779 = vcmp.eq.f32.partialorder %v688, %v761
        %vm780 = vcmp.eq.f32.partialorder %v689, %v740
        %vm781 = vcmp.eq.f32.partialorder %v690, %v761
        %vm782 = vcmp.eq.f32.partialorder %v691, %v740
        %vm783 = vcmp.eq.f32.partialorder %v692, %v761
        %vm784 = vcmp.eq.f32.partialorder %v693, %v740
        %vm785 = vcmp.eq.f32.partialorder %v694, %v761
        %vm786 = vcmp.eq.f32.partialorder %v695, %v740
        %vm787 = vcmp.eq.f32.partialorder %v696, %v761
        %vm788 = vcmp.eq.f32.partialorder %v697, %v740
        %vm789 = vcmp.eq.f32.partialorder %v698, %v761
        %vm790 = vcmp.eq.f32.partialorder %v699, %v740
        %vm791 = vcmp.eq.f32.partialorder %v700, %v761
        %vm792 = vcmp.eq.f32.partialorder %v701, %v740
        %vm793 = vcmp.eq.f32.partialorder %v702, %v761
        %v794 = vcvt.s32.f32 %v704
        %v795 = vcvt.s32.f32 %v705
        %v796 = vcvt.s32.f32 %v706
        %v797 = vcvt.s32.f32 %v707
        %v798 = vcvt.s32.f32 %v708
        %v799 = vcvt.s32.f32 %v709
        %v800 = vcvt.s32.f32 %v710
        %v801 = vcvt.s32.f32 %v711
        %v802 = vcvt.s32.f32 %v712
        %v803 = vcvt.s32.f32 %v713
        %v804 = vcvt.s32.f32 %v714
        %v805 = vcvt.s32.f32 %v715
        %v806 = vcvt.s32.f32 %v716
        %v807 = vcvt.s32.f32 %v717
        %v808 = vcvt.s32.f32 %v718
        %v809 = vcvt.s32.f32 %v719
        %v810 = vsel %vm762, %v794, 128.0
        %v811 = vsel %vm763, %v794, 128.0
        %v812 = vsel %vm764, %v795, 128.0
        %v813 = vsel %vm765, %v795, 128.0
        %v814 = vsel %vm766, %v796, 128.0
        %v815 = vsel %vm767, %v796, 128.0
        %v816 = vsel %vm768, %v797, 128.0
        %v817 = vsel %vm769, %v797, 128.0
        %v818 = vsel %vm770, %v798, 128.0
        %v819 = vsel %vm771, %v798, 128.0
        %v820 = vsel %vm772, %v799, 128.0
        %v821 = vsel %vm773, %v799, 128.0
        %v822 = vsel %vm774, %v800, 128.0
        %v823 = vsel %vm775, %v800, 128.0
        %v824 = vsel %vm776, %v801, 128.0
        %v825 = vsel %vm777, %v801, 128.0
        %v826 = vsel %vm778, %v802, 128.0
        %v827 = vsel %vm779, %v802, 128.0
        %v828 = vsel %vm780, %v803, 128.0
        %v829 = vsel %vm781, %v803, 128.0
        %v830 = vsel %vm782, %v804, 128.0
        %v831 = vsel %vm783, %v804, 128.0
        %v832 = vsel %vm784, %v805, 128.0
        %v833 = vsel %vm785, %v805, 128.0
        %v834 = vsel %vm786, %v806, 128.0
        %v835 = vsel %vm787, %v806, 128.0
        %v836 = vsel %vm788, %v807, 128.0
        %v837 = vsel %vm789, %v807, 128.0
        %v838 = vsel %vm790, %v808, 128.0
        %v839 = vsel %vm791, %v808, 128.0
        %v840 = vsel %vm792, %v809, 128.0
        %v841 = vsel %vm793, %v809, 128.0
        %v842 = vmin.f32 %v810, %v814
        %v843 = vmin.f32 %v812, %v816
        %v844 = vmin.f32 %v842, %v818
        %v845 = vmin.f32 %v843, %v820
        %v846 = vmin.f32 %v844, %v822
        %v847 = vmin.f32 %v845, %v824
        %v848 = vmin.f32 %v846, %v826
        %v849 = vmin.f32 %v847, %v828
        %v850 = vmin.f32 %v848, %v830
        %v851 = vmin.f32 %v849, %v832
        %v852 = vmin.f32 %v850, %v834
        %v853 = vmin.f32 %v851, %v836
        %v854 = vmin.f32 %v852, %v838
        %v855 = vmin.f32 %v853, %v840
        %v856 = vmin.f32 %v854, %v855
        %v857 = vrot.slane %v856, 4
        %v858 = vmin.f32 %v856, %v857
        %v859 = vrot.slane %v858, 2
        %v860 = vmin.f32 %v858, %v859
        %v861 = vrot.slane %v860, 1
        %v862 = vmin.f32 %v860, %v861
        %v863 = vmin.f32 %v811, %v815
        %v864 = vmin.f32 %v813, %v817
        %v865 = vmin.f32 %v863, %v819
        %v866 = vmin.f32 %v864, %v821
        %v867 = vmin.f32 %v865, %v823
        %v868 = vmin.f32 %v866, %v825
        %v869 = vmin.f32 %v867, %v827
        %v870 = vmin.f32 %v868, %v829
        %v871 = vmin.f32 %v869, %v831
        %v872 = vmin.f32 %v870, %v833
        %v873 = vmin.f32 %v871, %v835
        %v874 = vmin.f32 %v872, %v837
        %v875 = vmin.f32 %v873, %v839
        %v876 = vmin.f32 %v874, %v841
        %v877 = vmin.f32 %v875, %v876
        %v878 = vrot.slane %v877, 4
        %v879 = vmin.f32 %v877, %v878
        %v880 = vrot.slane %v879, 2
        %v881 = vmin.f32 %v879, %v880
        %v882 = vrot.slane %v881, 1
        %v883 = vmin.f32 %v881, %v882
        %v884 = vcvt.f32.s32.to.zero.pseudo %v862
        %v885 = vcvt.f32.s32.to.zero.pseudo %v883
        %vm886 = vcmp.eq.s32.totalorder %v704, %v884
        %vm887 = vcmp.eq.s32.totalorder %v704, %v885
        %vm888 = vcmp.eq.s32.totalorder %v705, %v884
        %vm889 = vcmp.eq.s32.totalorder %v705, %v885
        %vm890 = vcmp.eq.s32.totalorder %v706, %v884
        %vm891 = vcmp.eq.s32.totalorder %v706, %v885
        %vm892 = vcmp.eq.s32.totalorder %v707, %v884
        %vm893 = vcmp.eq.s32.totalorder %v707, %v885
        %vm894 = vcmp.eq.s32.totalorder %v708, %v884
        %vm895 = vcmp.eq.s32.totalorder %v708, %v885
        %vm896 = vcmp.eq.s32.totalorder %v709, %v884
        %vm897 = vcmp.eq.s32.totalorder %v709, %v885
        %vm898 = vcmp.eq.s32.totalorder %v710, %v884
        %vm899 = vcmp.eq.s32.totalorder %v710, %v885
        %vm900 = vcmp.eq.s32.totalorder %v711, %v884
        %vm901 = vcmp.eq.s32.totalorder %v711, %v885
        %vm902 = vcmp.eq.s32.totalorder %v712, %v884
        %vm903 = vcmp.eq.s32.totalorder %v712, %v885
        %vm904 = vcmp.eq.s32.totalorder %v713, %v884
        %vm905 = vcmp.eq.s32.totalorder %v713, %v885
        %vm906 = vcmp.eq.s32.totalorder %v714, %v884
        %vm907 = vcmp.eq.s32.totalorder %v714, %v885
        %vm908 = vcmp.eq.s32.totalorder %v715, %v884
        %vm909 = vcmp.eq.s32.totalorder %v715, %v885
        %vm910 = vcmp.eq.s32.totalorder %v716, %v884
        %vm911 = vcmp.eq.s32.totalorder %v716, %v885
        %vm912 = vcmp.eq.s32.totalorder %v717, %v884
        %vm913 = vcmp.eq.s32.totalorder %v717, %v885
        %vm914 = vcmp.eq.s32.totalorder %v718, %v884
        %vm915 = vcmp.eq.s32.totalorder %v718, %v885
        %vm916 = vcmp.eq.s32.totalorder %v719, %v884
        %vm917 = vcmp.eq.s32.totalorder %v719, %v885
        %v918 = vsel %vm886, 1.0, 0.0
        %v919 = vsel %vm887, 1.0, 0.0
        %v920 = vsel %vm888, 1.0, 0.0
        %v921 = vsel %vm889, 1.0, 0.0
        %v922 = vsel %vm890, 1.0, 0.0
        %v923 = vsel %vm891, 1.0, 0.0
        %v924 = vsel %vm892, 1.0, 0.0
        %v925 = vsel %vm893, 1.0, 0.0
        %v926 = vsel %vm894, 1.0, 0.0
        %v927 = vsel %vm895, 1.0, 0.0
        %v928 = vsel %vm896, 1.0, 0.0
        %v929 = vsel %vm897, 1.0, 0.0
        %v930 = vsel %vm898, 1.0, 0.0
        %v931 = vsel %vm899, 1.0, 0.0
        %v932 = vsel %vm900, 1.0, 0.0
        %v933 = vsel %vm901, 1.0, 0.0
        %v934 = vsel %vm902, 1.0, 0.0
        %v935 = vsel %vm903, 1.0, 0.0
        %v936 = vsel %vm904, 1.0, 0.0
        %v937 = vsel %vm905, 1.0, 0.0
        %v938 = vsel %vm906, 1.0, 0.0
        %v939 = vsel %vm907, 1.0, 0.0
        %v940 = vsel %vm908, 1.0, 0.0
        %v941 = vsel %vm909, 1.0, 0.0
        %v942 = vsel %vm910, 1.0, 0.0
        %v943 = vsel %vm911, 1.0, 0.0
        %v944 = vsel %vm912, 1.0, 0.0
        %v945 = vsel %vm913, 1.0, 0.0
        %v946 = vsel %vm914, 1.0, 0.0
        %v947 = vsel %vm915, 1.0, 0.0
        %v948 = vsel %vm916, 1.0, 0.0
        %v949 = vsel %vm917, 1.0, 0.0
        %v950 = vld [vmem:[%s2] sm:$0xf]
        %951 = vmatprep.subr.mxu0 %v919
        %952 = vmatpush1.msra.mxu0 %v918
        %953 = vmatprep.subr.mxu0 %v921
        %954 = vmatpush1.msra.mxu0 %v920
        %955 = vmatprep.subr.mxu0 %v923
        %956 = vmatpush1.msra.mxu0 %v922
        %957 = vmatprep.subr.mxu0 %v925
        %958 = vmatpush1.msra.mxu0 %v924
        %959 = vmatprep.subr.mxu0 %v927
        %960 = vmatpush1.msra.mxu0 %v926
        %961 = vmatprep.subr.mxu0 %v929
        %962 = vmatpush1.msra.mxu0 %v928
        %963 = vmatprep.subr.mxu0 %v931
        %964 = vmatpush1.msra.mxu0 %v930
        %965 = vmatprep.subr.mxu0 %v933
        %966 = vmatpush1.msra.mxu0 %v932
        %967 = vmatprep.subr.mxu0 %v935
        %968 = vmatpush1.msra.mxu0 %v934
        %969 = vmatprep.subr.mxu0 %v937
        %970 = vmatpush1.msra.mxu0 %v936
        %971 = vmatprep.subr.mxu0 %v939
        %972 = vmatpush1.msra.mxu0 %v938
        %973 = vmatprep.subr.mxu0 %v941
        %974 = vmatpush1.msra.mxu0 %v940
        %975 = vmatprep.subr.mxu0 %v943
        %976 = vmatpush1.msra.mxu0 %v942
        %977 = vmatprep.subr.mxu0 %v945
        %978 = vmatpush1.msra.mxu0 %v944
        %979 = vmatprep.subr.mxu0 %v947
        %980 = vmatpush1.msra.mxu0 %v946
        %981 = vmatprep.subr.mxu0 %v949
        %982 = vmatpush1.msra.mxu0 %v948
        %983 = vmatprep.subr.mxu0 0.0
        %984 = vmatpush1.msra.mxu0 0.0
        %985 = vmatprep.subr.mxu0 0.0
        %986 = vmatpush1.msra.mxu0 0.0
        %987 = vmatprep.subr.mxu0 0.0
        %988 = vmatpush1.msra.mxu0 0.0
        %989 = vmatprep.subr.mxu0 0.0
        %990 = vmatpush1.msra.mxu0 0.0
        %991 = vmatprep.subr.mxu0 0.0
        %992 = vmatpush1.msra.mxu0 0.0
        %993 = vmatprep.subr.mxu0 0.0
        %994 = vmatpush1.msra.mxu0 0.0
        %995 = vmatprep.subr.mxu0 0.0
        %996 = vmatpush1.msra.mxu0 0.0
        %997 = vmatprep.subr.mxu0 0.0
        %998 = vmatpush1.msra.mxu0 0.0
        %999 = vmatprep.subr.mxu0 0.0
        %1000 = vmatpush1.msra.mxu0 0.0
        %1001 = vmatprep.subr.mxu0 0.0
        %1002 = vmatpush1.msra.mxu0 0.0
        %1003 = vmatprep.subr.mxu0 0.0
        %1004 = vmatpush1.msra.mxu0 0.0
        %1005 = vmatprep.subr.mxu0 0.0
        %1006 = vmatpush1.msra.mxu0 0.0
        %1007 = vmatprep.subr.mxu0 0.0
        %1008 = vmatpush1.msra.mxu0 0.0
        %1009 = vmatprep.subr.mxu0 0.0
        %1010 = vmatpush1.msra.mxu0 0.0
        %1011 = vmatprep.subr.mxu0 0.0
        %1012 = vmatpush1.msra.mxu0 0.0
        %1013 = vmatprep.subr.mxu0 0.0
        %1014 = vmatpush1.msra.mxu0 0.0
        %1015 = vmatprep.mubr.f32.mxu0 0.0
        %1016 = vmatmul.mubr.f32.gmra.mrb[0].mxu0 %v950
        %v1017 = vpop.f32.mrb[0].mxu0
        %v1018 = vadd.f32 0.0, %v1017
        %v1019 = vpop.f32.mrb[0].mxu0
        %v1020 = vadd.f32 0.0, %v1019
        %1021 = vdwg.mxu0
        %v1024 = vcombine.low %v1018, %v1020
        %1026 = vst [vmem:[%s309] sm:$0xff] %v1024
        %v1027 = vcombine.low %v884, %v885
        %v1029 = vunpack.c.l.s4 1966171168
        %v1030 = vunpack.c.0.s8 %v1029
        %v1031 = vlaneseq
        %v1032 = vshrl.u32 %v1031, 7
        %v1033 = vsub.s32 %v1030, %v1032
        %v1034 = vrot.slane %v1027, %v1033
        %v1036 = vunpack.c.l.s4 1966171168
        %v1037 = vunpack.c.0.s8 %v1036
        %v1038 = vlaneseq
        %v1039 = vshrl.u32 %v1038, 7
        %v1040 = vsub.s32 %v1037, %v1039
        %v1041 = vrot.slane %v1034, %v1040
        %v1042 = vlaneseq
        %vm1043 = vcmp.ge.s32.totalorder %v1042, 0
        %vm1044 = vcmp.lt.s32.totalorder %v1042, 256
        %vm1045 = vmand %vm1043, %vm1044
        %1046 = vst.msk [vmem:[%s316] sm:$0x3] %vm1045, %v1041
        %v1048 = vsub.f32 %v1018, %v341
        %v1049 = vsub.f32 %v1020, %v359
        %v1050 = vmul.f32 %v1048, %v1048
        %v1051 = vmul.f32 %v1049, %v1049
        %v1052 = vsel %vm409, %v1050, 0.0
        %v1053 = vrot.slane %v1052, 4
        %v1054 = vadd.f32 %v1052, %v1053
        %v1055 = vrot.slane %v1054, 2
        %v1056 = vadd.f32 %v1054, %v1055
        %v1057 = vrot.slane %v1056, 1
        %v1058 = vadd.f32 %v1056, %v1057
        %v1059 = vsel %vm409, %v1051, 0.0
        %v1060 = vrot.slane %v1059, 4
        %v1061 = vadd.f32 %v1059, %v1060
        %v1062 = vrot.slane %v1061, 2
        %v1063 = vadd.f32 %v1061, %v1062
        %v1064 = vrot.slane %v1063, 1
        %v1065 = vadd.f32 %v1063, %v1064
        %v1066 = vadd.f32 %v918, %v919
        %1067 = vadd.xlane.f32.xlu0 %v1066
        %v1068 = vpop.xlane.xlu0 %1067
        %v1069 = vadd.f32 %v920, %v921
        %1070 = vadd.xlane.f32.xlu0 %v1069
        %v1071 = vpop.xlane.xlu0 %1070
        %v1072 = vadd.f32 %v922, %v923
        %1073 = vadd.xlane.f32.xlu0 %v1072
        %v1074 = vpop.xlane.xlu0 %1073
        %v1075 = vadd.f32 %v924, %v925
        %1076 = vadd.xlane.f32.xlu0 %v1075
        %v1077 = vpop.xlane.xlu0 %1076
        %v1078 = vadd.f32 %v926, %v927
        %1079 = vadd.xlane.f32.xlu0 %v1078
        %v1080 = vpop.xlane.xlu0 %1079
        %v1081 = vadd.f32 %v928, %v929
        %1082 = vadd.xlane.f32.xlu0 %v1081
        %v1083 = vpop.xlane.xlu0 %1082
        %v1084 = vadd.f32 %v930, %v931
        %1085 = vadd.xlane.f32.xlu0 %v1084
        %v1086 = vpop.xlane.xlu0 %1085
        %v1087 = vadd.f32 %v932, %v933
        %1088 = vadd.xlane.f32.xlu0 %v1087
        %v1089 = vpop.xlane.xlu0 %1088
        %v1090 = vadd.f32 %v934, %v935
        %1091 = vadd.xlane.f32.xlu0 %v1090
        %v1092 = vpop.xlane.xlu0 %1091
        %v1093 = vadd.f32 %v936, %v937
        %1094 = vadd.xlane.f32.xlu0 %v1093
        %v1095 = vpop.xlane.xlu0 %1094
        %v1096 = vadd.f32 %v938, %v939
        %1097 = vadd.xlane.f32.xlu0 %v1096
        %v1098 = vpop.xlane.xlu0 %1097
        %v1099 = vadd.f32 %v940, %v941
        %1100 = vadd.xlane.f32.xlu0 %v1099
        %v1101 = vpop.xlane.xlu0 %1100
        %v1102 = vadd.f32 %v942, %v943
        %1103 = vadd.xlane.f32.xlu0 %v1102
        %v1104 = vpop.xlane.xlu0 %1103
        %v1105 = vadd.f32 %v944, %v945
        %1106 = vadd.xlane.f32.xlu0 %v1105
        %v1107 = vpop.xlane.xlu0 %1106
        %v1108 = vadd.f32 %v946, %v947
        %1109 = vadd.xlane.f32.xlu0 %v1108
        %v1110 = vpop.xlane.xlu0 %1109
        %v1111 = vadd.f32 %v948, %v949
        %1112 = vadd.xlane.f32.xlu0 %v1111
        %v1113 = vpop.xlane.xlu0 %1112
        %v1130 = vlaneseq
        %v1131 = vand.u32 %v1130, 127
        %v1132 = vlaneseq
        %v1133 = vshrl.u32 %v1132, 7
        %v1134 = vsub.s32 %v1131, %v1133
        %v1135 = vrot.slane %v1068, %v1134
        %v1136 = vadd.s32 %v1131, 4294967288
        %v1137 = vlaneseq
        %v1138 = vshrl.u32 %v1137, 7
        %v1139 = vsub.s32 %v1136, %v1138
        %v1140 = vrot.slane %v1071, %v1139
        %vm1141 = vcmask 130112
        %v1142 = vsel %vm1141, %v1140, %v1135
        %v1143 = vadd.s32 %v1131, 4294967280
        %v1144 = vlaneseq
        %v1145 = vshrl.u32 %v1144, 7
        %v1146 = vsub.s32 %v1143, %v1145
        %v1147 = vrot.slane %v1074, %v1146
        %vm1148 = vcmask 195712
        %v1149 = vsel %vm1148, %v1147, %v1142
        %v1150 = vadd.s32 %v1131, 4294967272
        %v1151 = vlaneseq
        %v1152 = vshrl.u32 %v1151, 7
        %v1153 = vsub.s32 %v1150, %v1152
        %v1154 = vrot.slane %v1077, %v1153
        %vm1155 = vcmask 261312
        %v1156 = vsel %vm1155, %v1154, %v1149
        %v1157 = vadd.s32 %v1131, 4294967264
        %v1158 = vlaneseq
        %v1159 = vshrl.u32 %v1158, 7
        %v1160 = vsub.s32 %v1157, %v1159
        %v1161 = vrot.slane %v1080, %v1160
        %vm1162 = vcmask 326912
        %v1163 = vsel %vm1162, %v1161, %v1156
        %v1164 = vadd.s32 %v1131, 4294967256
        %v1165 = vlaneseq
        %v1166 = vshrl.u32 %v1165, 7
        %v1167 = vsub.s32 %v1164, %v1166
        %v1168 = vrot.slane %v1083, %v1167
        %vm1169 = vcmask 392512
        %v1170 = vsel %vm1169, %v1168, %v1163
        %v1171 = vadd.s32 %v1131, 4294967248
        %v1172 = vlaneseq
        %v1173 = vshrl.u32 %v1172, 7
        %v1174 = vsub.s32 %v1171, %v1173
        %v1175 = vrot.slane %v1086, %v1174
        %vm1176 = vcmask 458112
        %v1177 = vsel %vm1176, %v1175, %v1170
        %v1178 = vadd.s32 %v1131, 4294967240
        %v1179 = vlaneseq
        %v1180 = vshrl.u32 %v1179, 7
        %v1181 = vsub.s32 %v1178, %v1180
        %v1182 = vrot.slane %v1089, %v1181
        %vm1183 = vcmask 523712
        %v1184 = vsel %vm1183, %v1182, %v1177
        %v1185 = vadd.s32 %v1131, 4294967232
        %v1186 = vlaneseq
        %v1187 = vshrl.u32 %v1186, 7
        %v1188 = vsub.s32 %v1185, %v1187
        %v1189 = vrot.slane %v1092, %v1188
        %vm1190 = vcmask 589312
        %v1191 = vsel %vm1190, %v1189, %v1184
        %v1192 = vadd.s32 %v1131, 4294967224
        %v1193 = vlaneseq
        %v1194 = vshrl.u32 %v1193, 7
        %v1195 = vsub.s32 %v1192, %v1194
        %v1196 = vrot.slane %v1095, %v1195
        %vm1197 = vcmask 654912
        %v1198 = vsel %vm1197, %v1196, %v1191
        %v1199 = vadd.s32 %v1131, 4294967216
        %v1200 = vlaneseq
        %v1201 = vshrl.u32 %v1200, 7
        %v1202 = vsub.s32 %v1199, %v1201
        %v1203 = vrot.slane %v1098, %v1202
        %vm1204 = vcmask 720512
        %v1205 = vsel %vm1204, %v1203, %v1198
        %v1206 = vadd.s32 %v1131, 4294967208
        %v1207 = vlaneseq
        %v1208 = vshrl.u32 %v1207, 7
        %v1209 = vsub.s32 %v1206, %v1208
        %v1210 = vrot.slane %v1101, %v1209
        %vm1211 = vcmask 786112
        %v1212 = vsel %vm1211, %v1210, %v1205
        %v1213 = vadd.s32 %v1131, 4294967200
        %v1214 = vlaneseq
        %v1215 = vshrl.u32 %v1214, 7
        %v1216 = vsub.s32 %v1213, %v1215
        %v1217 = vrot.slane %v1104, %v1216
        %vm1218 = vcmask 851712
        %v1219 = vsel %vm1218, %v1217, %v1212
        %v1220 = vadd.s32 %v1131, 4294967192
        %v1221 = vlaneseq
        %v1222 = vshrl.u32 %v1221, 7
        %v1223 = vsub.s32 %v1220, %v1222
        %v1224 = vrot.slane %v1107, %v1223
        %vm1225 = vcmask 917312
        %v1226 = vsel %vm1225, %v1224, %v1219
        %v1227 = vadd.s32 %v1131, 4294967184
        %v1228 = vlaneseq
        %v1229 = vshrl.u32 %v1228, 7
        %v1230 = vsub.s32 %v1227, %v1229
        %v1231 = vrot.slane %v1110, %v1230
        %vm1232 = vcmask 982912
        %v1233 = vsel %vm1232, %v1231, %v1226
        %v1234 = vadd.s32 %v1131, 4294967176
        %v1235 = vlaneseq
        %v1236 = vshrl.u32 %v1235, 7
        %v1237 = vsub.s32 %v1234, %v1236
        %v1238 = vrot.slane %v1113, %v1237
        %vm1239 = vcmask 1048512
        %v1240 = vsel %vm1239, %v1238, %v1233
        %1242 = vst [vmem:[%s322] sm:$0x1] %v1240
        %v1245 = vcombine.low %v1058, %v1065
        %v1247 = vunpack.c.l.s4 1966171168
        %v1248 = vunpack.c.0.s8 %v1247
        %v1249 = vlaneseq
        %v1250 = vshrl.u32 %v1249, 7
        %v1251 = vsub.s32 %v1248, %v1250
        %v1252 = vrot.slane %v1245, %v1251
        %v1254 = vunpack.c.l.s4 1966171168
        %v1255 = vunpack.c.0.s8 %v1254
        %v1256 = vlaneseq
        %v1257 = vshrl.u32 %v1256, 7
        %v1258 = vsub.s32 %v1255, %v1257
        %v1259 = vrot.slane %v1252, %v1258
        %1261 = vst.msk [vmem:[%s329] sm:$0x3] %vm1045, %v1259
        %s1262 = sand.u32 %s141, 1
        %s1263 = scalar_lea.sflag [#allocation3], %s1262
        %s1264 = sand.u32 %s141, 1
        %s1265 = smul.addr %s1264, 8
        %s1266 = scalar_lea.vmem [#allocation2], %s1265
        %s1267 = sand.u32 %s28, 1
        %s1268 = scalar_lea.sflag [#allocation5], %s1267
        %s1269 = sand.u32 %s169, 1
        %s1270 = smul.addr %s1269, 2
        %s1271 = scalar_lea.vmem [#allocation4], %s1270
        %s1272 = sand.u32 %s28, 1
        %s1273 = scalar_lea.sflag [#allocation5], %s1272
        %s1274 = sand.u32 %s197, 1
        %s1275 = scalar_lea.vmem [#allocation6], %s1274
        %s1276 = sand.u32 %s225, 1
        %s1277 = scalar_lea.sflag [#allocation8], %s1276
        %s1278 = sand.u32 %s225, 1
        %s1279 = smul.addr %s1278, 2
        %s1280 = scalar_lea.vmem [#allocation7], %s1279
        // Predicated region
        $region37: #{tpu_custom_call.1} parent=35 // pred_check
          %p1281 = pneg %p151
        $region38: #{tpu_custom_call.1} parent=35 // pred_check_branch
          %1283 = sbr.rel (%p1281) target = $region40
        $region39: #{tpu_custom_call.1} parent=35 // pred_region
          %s1284 = smul.u32 2, %s33
          %s1286 = ssub.s32 128, 128
          %1287 = vsyncadd %s1263, %s1286
          %s1288 = smul.addr %s32, 2
          %s1289 = sadd.s32 %s1284, %s1288
          %s1290 = smul.addr %s1289, 64
          %s1291 = scalar_lea.hbm %s4, %s1290
          %s1293 = sshll.u32 %s1266, 4
          %s1294 = int_to_ptr.vmem [resolvable:$true] %s1293
          %1296 = dma.vmem_to_hbm [thread:$0]  %s1294, 128, %s1291, %s1263
        $region40: #{tpu_custom_call.1} parent=35 // pred_fallthru
          _
        // Predicated region
        $region41: #{tpu_custom_call.1} parent=35 // pred_check
          %p1297 = pneg %p179
        $region42: #{tpu_custom_call.1} parent=35 // pred_check_branch
          %1299 = sbr.rel (%p1297) target = $region44
        $region43: #{tpu_custom_call.1} parent=35 // pred_region
          %s1301 = ssub.s32 32, 32
          %1302 = vsyncadd %s1268, %s1301
          %s1303 = smul.addr %s33, 2
          %s1304 = smul.addr %s32, 2
          %s1305 = sadd.s32 %s1303, %s1304
          %s1306 = smul.addr %s1305, 16
          %s1307 = scalar_lea.hbm %s5, %s1306
          %s1309 = sshll.u32 %s1271, 4
          %s1310 = int_to_ptr.vmem [resolvable:$true] %s1309
          %1312 = dma.vmem_to_hbm [thread:$0]  %s1310, 32, %s1307, %s1268
        $region44: #{tpu_custom_call.1} parent=35 // pred_fallthru
          _
        // Predicated region
        $region45: #{tpu_custom_call.1} parent=35 // pred_check
          %p1313 = pneg %p207
        $region46: #{tpu_custom_call.1} parent=35 // pred_check_branch
          %1315 = sbr.rel (%p1313) target = $region48
        $region47: #{tpu_custom_call.1} parent=35 // pred_region
          %s1317 = ssub.s32 16, 16
          %1318 = vsyncadd %s1273, %s1317
          %s1319 = sadd.s32 %s33, %s32
          %s1320 = smul.addr %s1319, 16
          %s1321 = scalar_lea.hbm %s6, %s1320
          %s1323 = sshll.u32 %s1275, 4
          %s1324 = int_to_ptr.vmem [resolvable:$true] %s1323
          %1326 = dma.vmem_to_hbm [thread:$0]  %s1324, 16, %s1321, %s1273
        $region48: #{tpu_custom_call.1} parent=35 // pred_fallthru
          _
        // Predicated region
        $region49: #{tpu_custom_call.1} parent=35 // pred_check
          %p1327 = pneg %p235
        $region50: #{tpu_custom_call.1} parent=35 // pred_check_branch
          %1329 = sbr.rel (%p1327) target = $region52
        $region51: #{tpu_custom_call.1} parent=35 // pred_region
          %s1331 = ssub.s32 32, 32
          %1332 = vsyncadd %s1277, %s1331
          %s1333 = smul.addr %s33, 2
          %s1334 = smul.addr %s32, 2
          %s1335 = sadd.s32 %s1333, %s1334
          %s1336 = smul.addr %s1335, 16
          %s1337 = scalar_lea.hbm %s7, %s1336
          %s1339 = sshll.u32 %s1280, 4
          %s1340 = int_to_ptr.vmem [resolvable:$true] %s1339
          %1342 = dma.vmem_to_hbm [thread:$0]  %s1340, 32, %s1337, %s1277
        $region52: #{tpu_custom_call.1} parent=35 // pred_fallthru
          _
      $region36: #{tpu_custom_call.1} parent=5 // pred_fallthru
        _
      %p1343 = scmp.le.s32.totalorder 2, %s23
      // Predicated region
      $region53: #{tpu_custom_call.1} parent=5 // pred_check
        %p1344 = pneg %p1343
      $region54: #{tpu_custom_call.1} parent=5 // pred_check_branch
        %1346 = sbr.rel (%p1344) target = $region56
      $region55: #{tpu_custom_call.1} parent=5 // pred_region
        %s1347 = ssub.s32 %s23, 2
        // Predicated region
        $region57: #{tpu_custom_call.1} parent=55 // pred_check
          %p1348 = pneg %p157
        $region58: #{tpu_custom_call.1} parent=55 // pred_check_branch
          %1350 = sbr.rel (%p1348) target = $region60
        $region59: #{tpu_custom_call.1} parent=55 // pred_region
          %s1351 = sand.u32 %s142, 1
          %s1352 = scalar_lea.sflag [#allocation3], %s1351
          %s1353 = sand.u32 %s142, 1
          %s1354 = smul.addr %s1353, 8
          %s1355 = scalar_lea.vmem [#allocation2], %s1354
          %1356 = dma.done %s1352, 128
        $region60: #{tpu_custom_call.1} parent=55 // pred_fallthru
          _
        // Predicated region
        $region61: #{tpu_custom_call.1} parent=55 // pred_check
          %p1357 = pneg %p185
        $region62: #{tpu_custom_call.1} parent=55 // pred_check_branch
          %1359 = sbr.rel (%p1357) target = $region64
        $region63: #{tpu_custom_call.1} parent=55 // pred_region
          %s1360 = sand.u32 %s29, 1
          %s1361 = scalar_lea.sflag [#allocation5], %s1360
          %s1362 = sand.u32 %s170, 1
          %s1363 = smul.addr %s1362, 2
          %s1364 = scalar_lea.vmem [#allocation4], %s1363
          %1365 = dma.done %s1361, 32
        $region64: #{tpu_custom_call.1} parent=55 // pred_fallthru
          _
        // Predicated region
        $region65: #{tpu_custom_call.1} parent=55 // pred_check
          %p1366 = pneg %p213
        $region66: #{tpu_custom_call.1} parent=55 // pred_check_branch
          %1368 = sbr.rel (%p1366) target = $region68
        $region67: #{tpu_custom_call.1} parent=55 // pred_region
          %s1369 = sand.u32 %s29, 1
          %s1370 = scalar_lea.sflag [#allocation5], %s1369
          %s1371 = sand.u32 %s198, 1
          %s1372 = scalar_lea.vmem [#allocation6], %s1371
          %1373 = dma.done %s1370, 16
        $region68: #{tpu_custom_call.1} parent=55 // pred_fallthru
          _
        // Predicated region
        $region69: #{tpu_custom_call.1} parent=55 // pred_check
          %p1374 = pneg %p241
        $region70: #{tpu_custom_call.1} parent=55 // pred_check_branch
          %1376 = sbr.rel (%p1374) target = $region72
        $region71: #{tpu_custom_call.1} parent=55 // pred_region
          %s1377 = sand.u32 %s226, 1
          %s1378 = scalar_lea.sflag [#allocation8], %s1377
          %s1379 = sand.u32 %s226, 1
          %s1380 = smul.addr %s1379, 2
          %s1381 = scalar_lea.vmem [#allocation7], %s1380
          %1382 = dma.done %s1378, 32
        $region72: #{tpu_custom_call.1} parent=55 // pred_fallthru
          _
      $region56: #{tpu_custom_call.1} parent=5 // pred_fallthru
        _
    $region6: #{tpu_custom_call.1} parent=1 // loop_footer
      %s27 = sadd.s32 1, %s23
    $region7: #{tpu_custom_call.1} parent=1 // loop_footer_branch
      %22 = sbr.rel target = $region3
    $region8: #{tpu_custom_call.1} parent=1 // loop_exit
      _
    %1383 = vsyncpa [#allocation3], 1
    %s1384 = scalar_lea.sflag [#allocation3], 1
    %1385 = vsyncpa %s1384, 1
    %1386 = vsyncpa [#allocation5], 1
    %s1387 = scalar_lea.sflag [#allocation5], 1
    %1388 = vsyncpa %s1387, 1
    %1389 = vsyncpa [#allocation8], 1
    %s1390 = scalar_lea.sflag [#allocation8], 1
    %1391 = vsyncpa %s1390, 1

</llo_original>
